<compile_context>
chip_gen: v5e
topology: v5e:2x2
jax: 0.10.0
libtpu: 0.0.40
codegen_flags: <defaults>
</compile_context>

<pallas_src>
import functools

import jax
import jax.numpy as jnp
from jax.experimental import pallas as pl
from jax.experimental.pallas import tpu as pltpu

# Matmul operand dtype.  Keep f32 so the correctness check against the pure
# JAX reference stays tight; on v6e/v7x flip to jnp.bfloat16 for ~2x MXU rate
# and half the DMA bytes (accumulation stays f32 either way).
_MATMUL_DTYPE = jnp.float32


def _pick_tile(dim, prefs):
    """Largest preferred tile that evenly divides `dim`, else the full dim."""
    for p in prefs:
        if p <= dim and dim % p == 0:
            return p
    return dim


# ---------------------------------------------------------------------------
# Fused K / V projection kernel:
#   k = kx @ Wk.T + bk ;  v = vx @ Wv.T + bv     (W in PyTorch [out, in])
# One tiled-matmul grid, two outputs, two accumulators.
# ---------------------------------------------------------------------------
def _kv_proj_kernel(kx_ref, vx_ref, wk_ref, wv_ref, bk_ref, bv_ref,
                    ko_ref, vo_ref, kacc_ref, vacc_ref):
    kk = pl.program_id(2)

    @pl.when(kk == 0)
    def _():
        kacc_ref[...] = jnp.zeros_like(kacc_ref)
        vacc_ref[...] = jnp.zeros_like(vacc_ref)

    dn = (((1,), (1,)), ((), ()))   # contract last dims: consumes W untransposed
    kacc_ref[...] += jax.lax.dot_general(
        kx_ref[...].astype(_MATMUL_DTYPE), wk_ref[...].astype(_MATMUL_DTYPE),
        dimension_numbers=dn, preferred_element_type=jnp.float32)
    vacc_ref[...] += jax.lax.dot_general(
        vx_ref[...].astype(_MATMUL_DTYPE), wv_ref[...].astype(_MATMUL_DTYPE),
        dimension_numbers=dn, preferred_element_type=jnp.float32)

    @pl.when(kk == pl.num_programs(2) - 1)
    def _():
        ko_ref[...] = (kacc_ref[...] + bk_ref[...]).astype(ko_ref.dtype)
        vo_ref[...] = (vacc_ref[...] + bv_ref[...]).astype(vo_ref.dtype)


def kv_projections(kx, vx, wk, bk, wv, bv):
    """kx, vx: [M, K];  wk, wv: [N, K] (PyTorch layout);  bk, bv: [N]."""
    M, K = kx.shape
    N = wk.shape[0]
    tm = _pick_tile(M, (256, 128))
    tn = _pick_tile(N, (256, 128))
    tk = _pick_tile(K, (512, 256, 128))
    grid = (M // tm, N // tn, K // tk)
    return pl.pallas_call(
        _kv_proj_kernel,
        out_shape=(jax.ShapeDtypeStruct((M, N), jnp.float32),
                   jax.ShapeDtypeStruct((M, N), jnp.float32)),
        grid=grid,
        in_specs=[
            pl.BlockSpec((tm, tk), lambda i, j, k: (i, k)),
            pl.BlockSpec((tm, tk), lambda i, j, k: (i, k)),
            pl.BlockSpec((tn, tk), lambda i, j, k: (j, k)),
            pl.BlockSpec((tn, tk), lambda i, j, k: (j, k)),
            pl.BlockSpec((1, tn), lambda i, j, k: (0, j)),
            pl.BlockSpec((1, tn), lambda i, j, k: (0, j)),
        ],
        out_specs=(pl.BlockSpec((tm, tn), lambda i, j, k: (i, j)),
                   pl.BlockSpec((tm, tn), lambda i, j, k: (i, j))),
        scratch_shapes=[pltpu.VMEM((tm, tn), jnp.float32),
                        pltpu.VMEM((tm, tn), jnp.float32)],
        compiler_params=pltpu.CompilerParams(
            dimension_semantics=("parallel", "parallel", "arbitrary")),
    )(kx, vx, wk, wv, bk.reshape(1, N), bv.reshape(1, N))


# ---------------------------------------------------------------------------
# Fused attention kernel (per batch, per q-tile step):
#   q = (x_q @ Wq.T + bq) * scale
#   per head h: s_h = q_h @ k_h^T ; p_h = softmax(s_h)
#               out += (p_h @ v_h) @ Wo[:, h*Hd:(h+1)*Hd]^T ; w_acc += p_h
#   o = out + bo ;  avg_w = w_acc / H
# ---------------------------------------------------------------------------
def _fused_attn_kernel(xq_ref, k_ref, v_ref, wq_ref, bq_ref, wo_ref, bo_ref,
                       o_ref, w_ref, *, num_heads, head_dim, scale):
    dn = (((1,), (1,)), ((), ()))

    # Q projection + bias + 1/sqrt(head_dim) scaling, fused in-kernel.
    xq = xq_ref[0].astype(_MATMUL_DTYPE)              # (tq, E)
    wq = wq_ref[...].astype(_MATMUL_DTYPE)            # (E, E), PyTorch [out,in]
    q = jax.lax.dot_general(xq, wq, dimension_numbers=dn,
                            preferred_element_type=jnp.float32)
    q = (q + bq_ref[...]) * scale                     # (tq, E)

    k = k_ref[0]                                      # (S, E)
    v = v_ref[0]                                      # (S, E)
    wo = wo_ref[...].astype(_MATMUL_DTYPE)            # (E, E)

    tq, E = q.shape
    S = k.shape[0]

    w_acc = jnp.zeros((tq, S), jnp.float32)
    out_acc = jnp.zeros((tq, E), jnp.float32)
    for h in range(num_heads):                        # short static head loop
        sl = slice(h * head_dim, (h + 1) * head_dim)
        qh = q[:, sl]
        kh = k[:, sl].astype(_MATMUL_DTYPE)
        vh = v[:, sl].astype(_MATMUL_DTYPE)

        # QK^T via dot_general contracting last dims (no K transpose).
        s = jax.lax.dot_general(qh, kh, dimension_numbers=dn,
                                preferred_element_type=jnp.float32)  # (tq, S)

        s_max = jnp.max(s, axis=-1, keepdims=True)
        p = jnp.exp(s - s_max)
        denom = jnp.sum(p, axis=-1, keepdims=True)
        p = p * pl.reciprocal(denom, approx=True)     # EUP reciprocal

        w_acc = w_acc + p
        oh = jnp.dot(p.astype(_MATMUL_DTYPE), vh,
                     preferred_element_type=jnp.float32)             # (tq, Hd)
        # Fused output projection: accumulate o_h @ Wo[:, sl]^T (MXU only,
        # no lane-dim concatenate of the per-head outputs).
        out_acc = out_acc + jax.lax.dot_general(
            oh, wo[:, sl], dimension_numbers=dn,
            preferred_element_type=jnp.float32)                      # (tq, E)

    o_ref[0] = (out_acc + bo_ref[...]).astype(o_ref.dtype)
    w_ref[0] = w_acc * (1.0 / num_heads)


def fused_attention(xq, k, v, wq, bq, wo, bo, *, num_heads, scale):
    """xq: raw query [B, T, E]; k, v: projected [B, S, E].
    Returns (out [B, T, E], avg_weights [B, T, S])."""
    B, T, E = xq.shape
    S = k.shape[1]
    Hd = E // num_heads
    tq = _pick_tile(T, (256, 128))
    kernel = functools.partial(_fused_attn_kernel, num_heads=num_heads,
                               head_dim=Hd, scale=scale)
    return pl.pallas_call(
        kernel,
        out_shape=(
            jax.ShapeDtypeStruct((B, T, E), jnp.float32),
            jax.ShapeDtypeStruct((B, T, S), jnp.float32),
        ),
        grid=(B, T // tq),
        in_specs=[
            pl.BlockSpec((1, tq, E), lambda b, qi: (b, qi, 0)),
            pl.BlockSpec((1, S, E), lambda b, qi: (b, 0, 0)),
            pl.BlockSpec((1, S, E), lambda b, qi: (b, 0, 0)),
            pl.BlockSpec((E, E), lambda b, qi: (0, 0)),   # Wq (resident)
            pl.BlockSpec((1, E), lambda b, qi: (0, 0)),   # bq
            pl.BlockSpec((E, E), lambda b, qi: (0, 0)),   # Wo (resident)
            pl.BlockSpec((1, E), lambda b, qi: (0, 0)),   # bo
        ],
        out_specs=(
            pl.BlockSpec((1, tq, E), lambda b, qi: (b, qi, 0)),
            pl.BlockSpec((1, tq, S), lambda b, qi: (b, qi, 0)),
        ),
        compiler_params=pltpu.CompilerParams(
            dimension_semantics=("parallel", "parallel"),
            vmem_limit_bytes=64 * 1024 * 1024),
    )(xq, k, v, wq, bq.reshape(1, E), wo, bo.reshape(1, E))


# ---------------------------------------------------------------------------
# Full forward, mirroring multi_head_attention_forward (no masks, dropout=0)
# ---------------------------------------------------------------------------
def multi_head_attention_forward(params, query, key, value, *, num_heads):
    T, B, E = query.shape
    S = key.shape[0]
    Hd = E // num_heads
    scale = float(Hd) ** (-0.5)

    # Single batch-major relayout up front; everything downstream runs on
    # lane-dense [*, E] tiles (no per-head view/transpose passes).
    q_bm = jnp.transpose(query, (1, 0, 2))                    # [B, T, E]
    k_in = jnp.transpose(key, (1, 0, 2)).reshape(B * S, E)
    v_in = jnp.transpose(value, (1, 0, 2)).reshape(B * S, E)

    k, v = kv_projections(k_in, v_in, params["wk"], params["bk"],
                          params["wv"], params["bv"])
    k = k.reshape(B, S, E)
    v = v.reshape(B, S, E)

    out, avg_w = fused_attention(q_bm, k, v, params["wq"], params["bq"],
                                 params["wo"], params["bo"],
                                 num_heads=num_heads, scale=scale)
    out = jnp.transpose(out, (1, 0, 2))                       # -> [T, B, E]
    return out, avg_w


# ---------------------------------------------------------------------------
# Pure-JAX reference (matches the PyTorch math) for correctness checking
# ---------------------------------------------------------------------------
def _reference(params, query, key, value, num_heads):
    T, B, E = query.shape
    S = key.shape[0]
    Hd = E // num_heads
    scaling = float(Hd) ** (-0.5)
    q = query.reshape(T * B, E) @ params["wq"].T + params["bq"]
    k = key.reshape(S * B, E) @ params["wk"].T + params["bk"]
    v = value.reshape(S * B, E) @ params["wv"].T + params["bv"]
    q = q * scaling
    q = q.reshape(T, B * num_heads, Hd).transpose(1, 0, 2)
    k = k.reshape(S, B * num_heads, Hd).transpose(1, 0, 2)
    v = v.reshape(S, B * num_heads, Hd).transpose(1, 0, 2)
    s = jnp.einsum("btd,bsd->bts", q, k)
    p = jax.nn.softmax(s, axis=-1)
    o = jnp.einsum("bts,bsd->btd", p, v)
    o = o.transpose(1, 0, 2).reshape(T, B, E)
    out = o.reshape(T * B, E) @ params["wo"].T + params["bo"]
    return out.reshape(T, B, E), p.reshape(B, num_heads, T, S).mean(axis=1)


if __name__ == "__main__":
    embed_dim, num_heads = 32, 4
    tgt_len, src_len, bsz = 8, 8, 2

    key0 = jax.random.PRNGKey(0)
    ks = jax.random.split(key0, 11)

    def w_init(k):  # PyTorch weight layout [out, in]
        return jax.random.normal(k, (embed_dim, embed_dim), jnp.float32) * 0.05

    def b_init(k):
        return jax.random.normal(k, (embed_dim,), jnp.float32) * 0.05

    params = {
        "wq": w_init(ks[0]), "bq": b_init(ks[1]),
        "wk": w_init(ks[2]), "bk": b_init(ks[3]),
        "wv": w_init(ks[4]), "bv": b_init(ks[5]),
        "wo": w_init(ks[6]), "bo": b_init(ks[7]),
    }

    query = jax.random.normal(ks[8], (tgt_len, bsz, embed_dim), jnp.float32)
    key_in = jax.random.normal(ks[9], (src_len, bsz, embed_dim), jnp.float32)
    value = jax.random.normal(ks[10], (src_len, bsz, embed_dim), jnp.float32)

    fwd = jax.jit(functools.partial(multi_head_attention_forward,
                                    num_heads=num_heads))
    out, avg_w = fwd(params, query, key_in, value)
    out = jax.block_until_ready(out)
    avg_w = jax.block_until_ready(avg_w)

    ref_out, ref_w = _reference(params, query, key_in, value, num_heads)
    assert out.shape == (tgt_len, bsz, embed_dim)
    assert avg_w.shape == (bsz, tgt_len, src_len)
    # Tolerance slightly loosened vs f32-exact because the softmax denominator
    # uses the EUP approximate reciprocal.
    assert jnp.allclose(out, ref_out, atol=2e-3, rtol=2e-3)
    assert jnp.allclose(avg_w, ref_w, atol=2e-3, rtol=2e-3)

    print("KERNEL_OK")
</pallas_src>

<mosaic_0001>
module attributes {stable_mosaic.version = 11 : i64} {
  func.func @_fused_attn_kernel(%arg0: i32, %arg1: i32, %arg2: memref<1x8x32xf32, #tpu.memory_space<vmem>>, %arg3: memref<1x8x32xf32, #tpu.memory_space<vmem>>, %arg4: memref<1x8x32xf32, #tpu.memory_space<vmem>>, %arg5: memref<32x32xf32, #tpu.memory_space<vmem>>, %arg6: memref<1x32xf32, #tpu.memory_space<vmem>>, %arg7: memref<32x32xf32, #tpu.memory_space<vmem>>, %arg8: memref<1x32xf32, #tpu.memory_space<vmem>>, %arg9: memref<1x8x32xf32, #tpu.memory_space<vmem>>, %arg10: memref<1x8x8xf32, #tpu.memory_space<vmem>>) attributes {dimension_semantics = [#tpu.dimension_semantics<parallel>, #tpu.dimension_semantics<parallel>], iteration_bounds = array<i64: 2, 1>, scalar_prefetch = 0 : i64, scratch_operands = 0 : i64, tpu.core_type = #tpu.core_type<tc>, window_params = [{transform_indices = @transform_0, window_bounds = array<i64: 1, 8, 32>}, {transform_indices = @transform_1, window_bounds = array<i64: 1, 8, 32>}, {transform_indices = @transform_2, window_bounds = array<i64: 1, 8, 32>}, {pipeline_mode = #tpu.pipeline_mode<synchronous>, transform_indices = @transform_3, window_bounds = array<i64: 32, 32>}, {pipeline_mode = #tpu.pipeline_mode<synchronous>, transform_indices = @transform_4, window_bounds = array<i64: 1, 32>}, {pipeline_mode = #tpu.pipeline_mode<synchronous>, transform_indices = @transform_5, window_bounds = array<i64: 32, 32>}, {pipeline_mode = #tpu.pipeline_mode<synchronous>, transform_indices = @transform_6, window_bounds = array<i64: 1, 32>}, {transform_indices = @transform_7, window_bounds = array<i64: 1, 8, 32>}, {transform_indices = @transform_8, window_bounds = array<i64: 1, 8, 8>}]} {
    %c0 = arith.constant 0 : index
    %c0_0 = arith.constant 0 : index
    %c0_1 = arith.constant 0 : index
    %0 = vector.load %arg2[%c0, %c0_0, %c0_1] : memref<1x8x32xf32, #tpu.memory_space<vmem>>, vector<1x8x32xf32>
    %1 = vector.shape_cast %0 : vector<1x8x32xf32> to vector<8x32xf32>
    %c0_2 = arith.constant 0 : index
    %c0_3 = arith.constant 0 : index
    %2 = vector.load %arg5[%c0_2, %c0_3] : memref<32x32xf32, #tpu.memory_space<vmem>>, vector<32x32xf32>
    %cst = arith.constant dense<0.000000e+00> : vector<8x32xf32>
    %3 = tpu.matmul %1, %2, %cst {dimension_numbers = #tpu.dot_dimension_numbers<[1], [1], [0], [0], [0, 0, 1, 0], [], []>} : vector<8x32xf32>, vector<32x32xf32>, vector<8x32xf32> -> vector<8x32xf32>
    %c0_4 = arith.constant 0 : index
    %c0_5 = arith.constant 0 : index
    %4 = vector.load %arg6[%c0_4, %c0_5] : memref<1x32xf32, #tpu.memory_space<vmem>>, vector<1x32xf32>
    %5 = vector.broadcast %4 : vector<1x32xf32> to vector<8x32xf32>
    %6 = arith.addf %3, %5 : vector<8x32xf32>
    %cst_6 = arith.constant 0.353553385 : f32
    %7 = vector.broadcast %cst_6 : f32 to vector<8x32xf32>
    %8 = arith.mulf %6, %7 : vector<8x32xf32>
    %c0_7 = arith.constant 0 : index
    %c0_8 = arith.constant 0 : index
    %c0_9 = arith.constant 0 : index
    %9 = vector.load %arg3[%c0_7, %c0_8, %c0_9] : memref<1x8x32xf32, #tpu.memory_space<vmem>>, vector<1x8x32xf32>
    %10 = vector.shape_cast %9 : vector<1x8x32xf32> to vector<8x32xf32>
    %c0_10 = arith.constant 0 : index
    %c0_11 = arith.constant 0 : index
    %c0_12 = arith.constant 0 : index
    %11 = vector.load %arg4[%c0_10, %c0_11, %c0_12] : memref<1x8x32xf32, #tpu.memory_space<vmem>>, vector<1x8x32xf32>
    %12 = vector.shape_cast %11 : vector<1x8x32xf32> to vector<8x32xf32>
    %c0_13 = arith.constant 0 : index
    %c0_14 = arith.constant 0 : index
    %13 = vector.load %arg7[%c0_13, %c0_14] : memref<32x32xf32, #tpu.memory_space<vmem>>, vector<32x32xf32>
    %cst_15 = arith.constant 0.000000e+00 : f32
    %14 = vector.broadcast %cst_15 : f32 to vector<8x8xf32>
    %cst_16 = arith.constant 0.000000e+00 : f32
    %15 = vector.broadcast %cst_16 : f32 to vector<8x32xf32>
    %16 = vector.extract_strided_slice %8 {offsets = [0, 0], sizes = [8, 8], strides = [1, 1]} : vector<8x32xf32> to vector<8x8xf32>
    %17 = vector.extract_strided_slice %10 {offsets = [0, 0], sizes = [8, 8], strides = [1, 1]} : vector<8x32xf32> to vector<8x8xf32>
    %18 = vector.extract_strided_slice %12 {offsets = [0, 0], sizes = [8, 8], strides = [1, 1]} : vector<8x32xf32> to vector<8x8xf32>
    %cst_17 = arith.constant dense<0.000000e+00> : vector<8x8xf32>
    %19 = tpu.matmul %16, %17, %cst_17 {dimension_numbers = #tpu.dot_dimension_numbers<[1], [1], [0], [0], [0, 0, 1, 0], [], []>} : vector<8x8xf32>, vector<8x8xf32>, vector<8x8xf32> -> vector<8x8xf32>
    %cst_18 = arith.constant dense<0xFF800000> : vector<8xf32>
    %20 = vector.multi_reduction <maximumf>, %19, %cst_18 [1] : vector<8x8xf32> to vector<8xf32>
    %21 = vector.shape_cast %20 : vector<8xf32> to vector<8x1xf32>
    %22 = vector.broadcast %21 : vector<8x1xf32> to vector<8x8xf32>
    %23 = arith.subf %19, %22 : vector<8x8xf32>
    %24 = math.exp %23 : vector<8x8xf32>
    %cst_19 = arith.constant dense<0.000000e+00> : vector<8xf32>
    %25 = vector.multi_reduction <add>, %24, %cst_19 [1] : vector<8x8xf32> to vector<8xf32>
    %26 = vector.shape_cast %25 : vector<8xf32> to vector<8x1xf32>
    %27 = tpu.reciprocal %26 {approx = true} : vector<8x1xf32> -> vector<8x1xf32>
    %28 = vector.broadcast %27 : vector<8x1xf32> to vector<8x8xf32>
    %29 = arith.mulf %24, %28 : vector<8x8xf32>
    %30 = arith.addf %14, %29 : vector<8x8xf32>
    %cst_20 = arith.constant dense<0.000000e+00> : vector<8x8xf32>
    %31 = tpu.matmul %29, %18, %cst_20 {dimension_numbers = #tpu.dot_dimension_numbers<[1], [0], [0], [1], [0, 0, 1, 1], [], []>} : vector<8x8xf32>, vector<8x8xf32>, vector<8x8xf32> -> vector<8x8xf32>
    %32 = vector.extract_strided_slice %13 {offsets = [0, 0], sizes = [32, 8], strides = [1, 1]} : vector<32x32xf32> to vector<32x8xf32>
    %cst_21 = arith.constant dense<0.000000e+00> : vector<8x32xf32>
    %33 = tpu.matmul %31, %32, %cst_21 {dimension_numbers = #tpu.dot_dimension_numbers<[1], [1], [0], [0], [0, 0, 1, 0], [], []>} : vector<8x8xf32>, vector<32x8xf32>, vector<8x32xf32> -> vector<8x32xf32>
    %34 = arith.addf %15, %33 : vector<8x32xf32>
    %35 = vector.extract_strided_slice %8 {offsets = [0, 8], sizes = [8, 8], strides = [1, 1]} : vector<8x32xf32> to vector<8x8xf32>
    %36 = vector.extract_strided_slice %10 {offsets = [0, 8], sizes = [8, 8], strides = [1, 1]} : vector<8x32xf32> to vector<8x8xf32>
    %37 = vector.extract_strided_slice %12 {offsets = [0, 8], sizes = [8, 8], strides = [1, 1]} : vector<8x32xf32> to vector<8x8xf32>
    %cst_22 = arith.constant dense<0.000000e+00> : vector<8x8xf32>
    %38 = tpu.matmul %35, %36, %cst_22 {dimension_numbers = #tpu.dot_dimension_numbers<[1], [1], [0], [0], [0, 0, 1, 0], [], []>} : vector<8x8xf32>, vector<8x8xf32>, vector<8x8xf32> -> vector<8x8xf32>
    %cst_23 = arith.constant dense<0xFF800000> : vector<8xf32>
    %39 = vector.multi_reduction <maximumf>, %38, %cst_23 [1] : vector<8x8xf32> to vector<8xf32>
    %40 = vector.shape_cast %39 : vector<8xf32> to vector<8x1xf32>
    %41 = vector.broadcast %40 : vector<8x1xf32> to vector<8x8xf32>
    %42 = arith.subf %38, %41 : vector<8x8xf32>
    %43 = math.exp %42 : vector<8x8xf32>
    %cst_24 = arith.constant dense<0.000000e+00> : vector<8xf32>
    %44 = vector.multi_reduction <add>, %43, %cst_24 [1] : vector<8x8xf32> to vector<8xf32>
    %45 = vector.shape_cast %44 : vector<8xf32> to vector<8x1xf32>
    %46 = tpu.reciprocal %45 {approx = true} : vector<8x1xf32> -> vector<8x1xf32>
    %47 = vector.broadcast %46 : vector<8x1xf32> to vector<8x8xf32>
    %48 = arith.mulf %43, %47 : vector<8x8xf32>
    %49 = arith.addf %30, %48 : vector<8x8xf32>
    %cst_25 = arith.constant dense<0.000000e+00> : vector<8x8xf32>
    %50 = tpu.matmul %48, %37, %cst_25 {dimension_numbers = #tpu.dot_dimension_numbers<[1], [0], [0], [1], [0, 0, 1, 1], [], []>} : vector<8x8xf32>, vector<8x8xf32>, vector<8x8xf32> -> vector<8x8xf32>
    %51 = vector.extract_strided_slice %13 {offsets = [0, 8], sizes = [32, 8], strides = [1, 1]} : vector<32x32xf32> to vector<32x8xf32>
    %cst_26 = arith.constant dense<0.000000e+00> : vector<8x32xf32>
    %52 = tpu.matmul %50, %51, %cst_26 {dimension_numbers = #tpu.dot_dimension_numbers<[1], [1], [0], [0], [0, 0, 1, 0], [], []>} : vector<8x8xf32>, vector<32x8xf32>, vector<8x32xf32> -> vector<8x32xf32>
    %53 = arith.addf %34, %52 : vector<8x32xf32>
    %54 = vector.extract_strided_slice %8 {offsets = [0, 16], sizes = [8, 8], strides = [1, 1]} : vector<8x32xf32> to vector<8x8xf32>
    %55 = vector.extract_strided_slice %10 {offsets = [0, 16], sizes = [8, 8], strides = [1, 1]} : vector<8x32xf32> to vector<8x8xf32>
    %56 = vector.extract_strided_slice %12 {offsets = [0, 16], sizes = [8, 8], strides = [1, 1]} : vector<8x32xf32> to vector<8x8xf32>
    %cst_27 = arith.constant dense<0.000000e+00> : vector<8x8xf32>
    %57 = tpu.matmul %54, %55, %cst_27 {dimension_numbers = #tpu.dot_dimension_numbers<[1], [1], [0], [0], [0, 0, 1, 0], [], []>} : vector<8x8xf32>, vector<8x8xf32>, vector<8x8xf32> -> vector<8x8xf32>
    %cst_28 = arith.constant dense<0xFF800000> : vector<8xf32>
    %58 = vector.multi_reduction <maximumf>, %57, %cst_28 [1] : vector<8x8xf32> to vector<8xf32>
    %59 = vector.shape_cast %58 : vector<8xf32> to vector<8x1xf32>
    %60 = vector.broadcast %59 : vector<8x1xf32> to vector<8x8xf32>
    %61 = arith.subf %57, %60 : vector<8x8xf32>
    %62 = math.exp %61 : vector<8x8xf32>
    %cst_29 = arith.constant dense<0.000000e+00> : vector<8xf32>
    %63 = vector.multi_reduction <add>, %62, %cst_29 [1] : vector<8x8xf32> to vector<8xf32>
    %64 = vector.shape_cast %63 : vector<8xf32> to vector<8x1xf32>
    %65 = tpu.reciprocal %64 {approx = true} : vector<8x1xf32> -> vector<8x1xf32>
    %66 = vector.broadcast %65 : vector<8x1xf32> to vector<8x8xf32>
    %67 = arith.mulf %62, %66 : vector<8x8xf32>
    %68 = arith.addf %49, %67 : vector<8x8xf32>
    %cst_30 = arith.constant dense<0.000000e+00> : vector<8x8xf32>
    %69 = tpu.matmul %67, %56, %cst_30 {dimension_numbers = #tpu.dot_dimension_numbers<[1], [0], [0], [1], [0, 0, 1, 1], [], []>} : vector<8x8xf32>, vector<8x8xf32>, vector<8x8xf32> -> vector<8x8xf32>
    %70 = vector.extract_strided_slice %13 {offsets = [0, 16], sizes = [32, 8], strides = [1, 1]} : vector<32x32xf32> to vector<32x8xf32>
    %cst_31 = arith.constant dense<0.000000e+00> : vector<8x32xf32>
    %71 = tpu.matmul %69, %70, %cst_31 {dimension_numbers = #tpu.dot_dimension_numbers<[1], [1], [0], [0], [0, 0, 1, 0], [], []>} : vector<8x8xf32>, vector<32x8xf32>, vector<8x32xf32> -> vector<8x32xf32>
    %72 = arith.addf %53, %71 : vector<8x32xf32>
    %73 = vector.extract_strided_slice %8 {offsets = [0, 24], sizes = [8, 8], strides = [1, 1]} : vector<8x32xf32> to vector<8x8xf32>
    %74 = vector.extract_strided_slice %10 {offsets = [0, 24], sizes = [8, 8], strides = [1, 1]} : vector<8x32xf32> to vector<8x8xf32>
    %75 = vector.extract_strided_slice %12 {offsets = [0, 24], sizes = [8, 8], strides = [1, 1]} : vector<8x32xf32> to vector<8x8xf32>
    %cst_32 = arith.constant dense<0.000000e+00> : vector<8x8xf32>
    %76 = tpu.matmul %73, %74, %cst_32 {dimension_numbers = #tpu.dot_dimension_numbers<[1], [1], [0], [0], [0, 0, 1, 0], [], []>} : vector<8x8xf32>, vector<8x8xf32>, vector<8x8xf32> -> vector<8x8xf32>
    %cst_33 = arith.constant dense<0xFF800000> : vector<8xf32>
    %77 = vector.multi_reduction <maximumf>, %76, %cst_33 [1] : vector<8x8xf32> to vector<8xf32>
    %78 = vector.shape_cast %77 : vector<8xf32> to vector<8x1xf32>
    %79 = vector.broadcast %78 : vector<8x1xf32> to vector<8x8xf32>
    %80 = arith.subf %76, %79 : vector<8x8xf32>
    %81 = math.exp %80 : vector<8x8xf32>
    %cst_34 = arith.constant dense<0.000000e+00> : vector<8xf32>
    %82 = vector.multi_reduction <add>, %81, %cst_34 [1] : vector<8x8xf32> to vector<8xf32>
    %83 = vector.shape_cast %82 : vector<8xf32> to vector<8x1xf32>
    %84 = tpu.reciprocal %83 {approx = true} : vector<8x1xf32> -> vector<8x1xf32>
    %85 = vector.broadcast %84 : vector<8x1xf32> to vector<8x8xf32>
    %86 = arith.mulf %81, %85 : vector<8x8xf32>
    %87 = arith.addf %68, %86 : vector<8x8xf32>
    %cst_35 = arith.constant dense<0.000000e+00> : vector<8x8xf32>
    %88 = tpu.matmul %86, %75, %cst_35 {dimension_numbers = #tpu.dot_dimension_numbers<[1], [0], [0], [1], [0, 0, 1, 1], [], []>} : vector<8x8xf32>, vector<8x8xf32>, vector<8x8xf32> -> vector<8x8xf32>
    %89 = vector.extract_strided_slice %13 {offsets = [0, 24], sizes = [32, 8], strides = [1, 1]} : vector<32x32xf32> to vector<32x8xf32>
    %cst_36 = arith.constant dense<0.000000e+00> : vector<8x32xf32>
    %90 = tpu.matmul %88, %89, %cst_36 {dimension_numbers = #tpu.dot_dimension_numbers<[1], [1], [0], [0], [0, 0, 1, 0], [], []>} : vector<8x8xf32>, vector<32x8xf32>, vector<8x32xf32> -> vector<8x32xf32>
    %91 = arith.addf %72, %90 : vector<8x32xf32>
    %c0_37 = arith.constant 0 : index
    %c0_38 = arith.constant 0 : index
    %92 = vector.load %arg8[%c0_37, %c0_38] : memref<1x32xf32, #tpu.memory_space<vmem>>, vector<1x32xf32>
    %93 = vector.broadcast %92 : vector<1x32xf32> to vector<8x32xf32>
    %94 = arith.addf %91, %93 : vector<8x32xf32>
    %c0_39 = arith.constant 0 : index
    %c0_40 = arith.constant 0 : index
    %c0_41 = arith.constant 0 : index
    %95 = vector.load %arg9[%c0_39, %c0_40, %c0_41] : memref<1x8x32xf32, #tpu.memory_space<vmem>>, vector<1x8x32xf32>
    %96 = vector.shape_cast %95 : vector<1x8x32xf32> to vector<8x32xf32>
    %97 = vector.shape_cast %94 : vector<8x32xf32> to vector<1x8x32xf32>
    tpu.vector_store %arg9[%c0_39, %c0_40, %c0_41], %97 {strides = array<i32>} : memref<1x8x32xf32, #tpu.memory_space<vmem>>, vector<1x8x32xf32>,
    %cst_42 = arith.constant 2.500000e-01 : f32
    %98 = vector.broadcast %cst_42 : f32 to vector<8x8xf32>
    %99 = arith.mulf %87, %98 : vector<8x8xf32>
    %c0_43 = arith.constant 0 : index
    %c0_44 = arith.constant 0 : index
    %c0_45 = arith.constant 0 : index
    %100 = vector.load %arg10[%c0_43, %c0_44, %c0_45] : memref<1x8x8xf32, #tpu.memory_space<vmem>>, vector<1x8x8xf32>
    %101 = vector.shape_cast %100 : vector<1x8x8xf32> to vector<8x8xf32>
    %102 = vector.shape_cast %99 : vector<8x8xf32> to vector<1x8x8xf32>
    tpu.vector_store %arg10[%c0_43, %c0_44, %c0_45], %102 {strides = array<i32>} : memref<1x8x8xf32, #tpu.memory_space<vmem>>, vector<1x8x8xf32>,
    return
  }
  func.func @transform_0(%arg0: i32, %arg1: i32) -> (i32, i32, i32) {
    %c0_i32 = arith.constant 0 : i32
    %c0_i32_0 = arith.constant 0 : i32
    return %arg0, %arg1, %c0_i32 : i32, i32, i32
  }
  func.func @transform_1(%arg0: i32, %arg1: i32) -> (i32, i32, i32) {
    %c0_i32 = arith.constant 0 : i32
    %c0_i32_0 = arith.constant 0 : i32
    %c0_i32_1 = arith.constant 0 : i32
    return %arg0, %c0_i32, %c0_i32_0 : i32, i32, i32
  }
  func.func @transform_2(%arg0: i32, %arg1: i32) -> (i32, i32, i32) {
    %c0_i32 = arith.constant 0 : i32
    %c0_i32_0 = arith.constant 0 : i32
    %c0_i32_1 = arith.constant 0 : i32
    return %arg0, %c0_i32, %c0_i32_0 : i32, i32, i32
  }
  func.func @transform_3(%arg0: i32, %arg1: i32) -> (i32, i32) {
    %c0_i32 = arith.constant 0 : i32
    %c0_i32_0 = arith.constant 0 : i32
    %c0_i32_1 = arith.constant 0 : i32
    return %c0_i32, %c0_i32_0 : i32, i32
  }
  func.func @transform_4(%arg0: i32, %arg1: i32) -> (i32, i32) {
    %c0_i32 = arith.constant 0 : i32
    %c0_i32_0 = arith.constant 0 : i32
    %c0_i32_1 = arith.constant 0 : i32
    return %c0_i32, %c0_i32_0 : i32, i32
  }
  func.func @transform_5(%arg0: i32, %arg1: i32) -> (i32, i32) {
    %c0_i32 = arith.constant 0 : i32
    %c0_i32_0 = arith.constant 0 : i32
    %c0_i32_1 = arith.constant 0 : i32
    return %c0_i32, %c0_i32_0 : i32, i32
  }
  func.func @transform_6(%arg0: i32, %arg1: i32) -> (i32, i32) {
    %c0_i32 = arith.constant 0 : i32
    %c0_i32_0 = arith.constant 0 : i32
    %c0_i32_1 = arith.constant 0 : i32
    return %c0_i32, %c0_i32_0 : i32, i32
  }
  func.func @transform_7(%arg0: i32, %arg1: i32) -> (i32, i32, i32) {
    %c0_i32 = arith.constant 0 : i32
    %c0_i32_0 = arith.constant 0 : i32
    return %arg0, %arg1, %c0_i32 : i32, i32, i32
  }
  func.func @transform_8(%arg0: i32, %arg1: i32) -> (i32, i32, i32) {
    %c0_i32 = arith.constant 0 : i32
    %c0_i32_0 = arith.constant 0 : i32
    return %arg0, %arg1, %c0_i32 : i32, i32, i32
  }
}

module attributes {stable_mosaic.version = 11 : i64} {
  func.func @_kv_proj_kernel(%arg0: i32, %arg1: i32, %arg2: i32, %arg3: memref<16x32xf32, #tpu.memory_space<vmem>>, %arg4: memref<16x32xf32, #tpu.memory_space<vmem>>, %arg5: memref<32x32xf32, #tpu.memory_space<vmem>>, %arg6: memref<32x32xf32, #tpu.memory_space<vmem>>, %arg7: memref<1x32xf32, #tpu.memory_space<vmem>>, %arg8: memref<1x32xf32, #tpu.memory_space<vmem>>, %arg9: memref<16x32xf32, #tpu.memory_space<vmem>>, %arg10: memref<16x32xf32, #tpu.memory_space<vmem>>, %arg11: memref<16x32xf32, #tpu.memory_space<vmem>>, %arg12: memref<16x32xf32, #tpu.memory_space<vmem>>) attributes {dimension_semantics = [#tpu.dimension_semantics<parallel>, #tpu.dimension_semantics<parallel>, #tpu.dimension_semantics<arbitrary>], iteration_bounds = array<i64: 1, 1, 1>, scalar_prefetch = 0 : i64, scratch_operands = 2 : i64, tpu.core_type = #tpu.core_type<tc>, window_params = [{transform_indices = @transform_0, window_bounds = array<i64: 16, 32>}, {transform_indices = @transform_1, window_bounds = array<i64: 16, 32>}, {transform_indices = @transform_2, window_bounds = array<i64: 32, 32>}, {transform_indices = @transform_3, window_bounds = array<i64: 32, 32>}, {transform_indices = @transform_4, window_bounds = array<i64: 1, 32>}, {transform_indices = @transform_5, window_bounds = array<i64: 1, 32>}, {transform_indices = @transform_6, window_bounds = array<i64: 16, 32>}, {transform_indices = @transform_7, window_bounds = array<i64: 16, 32>}]} {
    %c0_i32 = arith.constant 0 : i32
    %0 = arith.cmpi eq, %arg2, %c0_i32 : i32
    %1 = arith.extui %0 : i1 to i32
    %c0_i32_0 = arith.constant 0 : i32
    %2 = arith.cmpi ne, %1, %c0_i32_0 : i32
    scf.if %2 {
      %cst_19 = arith.constant 0.000000e+00 : f32
      %18 = vector.broadcast %cst_19 : f32 to vector<16x32xf32>
      %c0_20 = arith.constant 0 : index
      %c0_21 = arith.constant 0 : index
      %19 = vector.load %arg11[%c0_20, %c0_21] : memref<16x32xf32, #tpu.memory_space<vmem>>, vector<16x32xf32>
      tpu.vector_store %arg11[%c0_20, %c0_21], %18 {strides = array<i32>} : memref<16x32xf32, #tpu.memory_space<vmem>>, vector<16x32xf32>,
      %cst_22 = arith.constant 0.000000e+00 : f32
      %20 = vector.broadcast %cst_22 : f32 to vector<16x32xf32>
      %c0_23 = arith.constant 0 : index
      %c0_24 = arith.constant 0 : index
      %21 = vector.load %arg12[%c0_23, %c0_24] : memref<16x32xf32, #tpu.memory_space<vmem>>, vector<16x32xf32>
      tpu.vector_store %arg12[%c0_23, %c0_24], %20 {strides = array<i32>} : memref<16x32xf32, #tpu.memory_space<vmem>>, vector<16x32xf32>,
    } else {
    }
    %c0 = arith.constant 0 : index
    %c0_1 = arith.constant 0 : index
    %3 = vector.load %arg11[%c0, %c0_1] : memref<16x32xf32, #tpu.memory_space<vmem>>, vector<16x32xf32>
    %c0_2 = arith.constant 0 : index
    %c0_3 = arith.constant 0 : index
    %4 = vector.load %arg3[%c0_2, %c0_3] : memref<16x32xf32, #tpu.memory_space<vmem>>, vector<16x32xf32>
    %c0_4 = arith.constant 0 : index
    %c0_5 = arith.constant 0 : index
    %5 = vector.load %arg5[%c0_4, %c0_5] : memref<32x32xf32, #tpu.memory_space<vmem>>, vector<32x32xf32>
    %cst = arith.constant dense<0.000000e+00> : vector<16x32xf32>
    %6 = tpu.matmul %4, %5, %cst {dimension_numbers = #tpu.dot_dimension_numbers<[1], [1], [0], [0], [0, 0, 1, 0], [], []>} : vector<16x32xf32>, vector<32x32xf32>, vector<16x32xf32> -> vector<16x32xf32>
    %7 = arith.addf %3, %6 : vector<16x32xf32>
    %c0_6 = arith.constant 0 : index
    %c0_7 = arith.constant 0 : index
    %8 = vector.load %arg11[%c0_6, %c0_7] : memref<16x32xf32, #tpu.memory_space<vmem>>, vector<16x32xf32>
    tpu.vector_store %arg11[%c0_6, %c0_7], %7 {strides = array<i32>} : memref<16x32xf32, #tpu.memory_space<vmem>>, vector<16x32xf32>,
    %c0_8 = arith.constant 0 : index
    %c0_9 = arith.constant 0 : index
    %9 = vector.load %arg12[%c0_8, %c0_9] : memref<16x32xf32, #tpu.memory_space<vmem>>, vector<16x32xf32>
    %c0_10 = arith.constant 0 : index
    %c0_11 = arith.constant 0 : index
    %10 = vector.load %arg4[%c0_10, %c0_11] : memref<16x32xf32, #tpu.memory_space<vmem>>, vector<16x32xf32>
    %c0_12 = arith.constant 0 : index
    %c0_13 = arith.constant 0 : index
    %11 = vector.load %arg6[%c0_12, %c0_13] : memref<32x32xf32, #tpu.memory_space<vmem>>, vector<32x32xf32>
    %cst_14 = arith.constant dense<0.000000e+00> : vector<16x32xf32>
    %12 = tpu.matmul %10, %11, %cst_14 {dimension_numbers = #tpu.dot_dimension_numbers<[1], [1], [0], [0], [0, 0, 1, 0], [], []>} : vector<16x32xf32>, vector<32x32xf32>, vector<16x32xf32> -> vector<16x32xf32>
    %13 = arith.addf %9, %12 : vector<16x32xf32>
    %c0_15 = arith.constant 0 : index
    %c0_16 = arith.constant 0 : index
    %14 = vector.load %arg12[%c0_15, %c0_16] : memref<16x32xf32, #tpu.memory_space<vmem>>, vector<16x32xf32>
    tpu.vector_store %arg12[%c0_15, %c0_16], %13 {strides = array<i32>} : memref<16x32xf32, #tpu.memory_space<vmem>>, vector<16x32xf32>,
    %c0_i32_17 = arith.constant 0 : i32
    %15 = arith.cmpi eq, %arg2, %c0_i32_17 : i32
    %16 = arith.extui %15 : i1 to i32
    %c0_i32_18 = arith.constant 0 : i32
    %17 = arith.cmpi ne, %16, %c0_i32_18 : i32
    scf.if %17 {
      %c0_19 = arith.constant 0 : index
      %c0_20 = arith.constant 0 : index
      %18 = vector.load %arg11[%c0_19, %c0_20] : memref<16x32xf32, #tpu.memory_space<vmem>>, vector<16x32xf32>
      %c0_21 = arith.constant 0 : index
      %c0_22 = arith.constant 0 : index
      %19 = vector.load %arg7[%c0_21, %c0_22] : memref<1x32xf32, #tpu.memory_space<vmem>>, vector<1x32xf32>
      %20 = vector.broadcast %19 : vector<1x32xf32> to vector<16x32xf32>
      %21 = arith.addf %18, %20 : vector<16x32xf32>
      %c0_23 = arith.constant 0 : index
      %c0_24 = arith.constant 0 : index
      %22 = vector.load %arg9[%c0_23, %c0_24] : memref<16x32xf32, #tpu.memory_space<vmem>>, vector<16x32xf32>
      tpu.vector_store %arg9[%c0_23, %c0_24], %21 {strides = array<i32>} : memref<16x32xf32, #tpu.memory_space<vmem>>, vector<16x32xf32>,
      %c0_25 = arith.constant 0 : index
      %c0_26 = arith.constant 0 : index
      %23 = vector.load %arg12[%c0_25, %c0_26] : memref<16x32xf32, #tpu.memory_space<vmem>>, vector<16x32xf32>
      %c0_27 = arith.constant 0 : index
      %c0_28 = arith.constant 0 : index
      %24 = vector.load %arg8[%c0_27, %c0_28] : memref<1x32xf32, #tpu.memory_space<vmem>>, vector<1x32xf32>
      %25 = vector.broadcast %24 : vector<1x32xf32> to vector<16x32xf32>
      %26 = arith.addf %23, %25 : vector<16x32xf32>
      %c0_29 = arith.constant 0 : index
      %c0_30 = arith.constant 0 : index
      %27 = vector.load %arg10[%c0_29, %c0_30] : memref<16x32xf32, #tpu.memory_space<vmem>>, vector<16x32xf32>
      tpu.vector_store %arg10[%c0_29, %c0_30], %26 {strides = array<i32>} : memref<16x32xf32, #tpu.memory_space<vmem>>, vector<16x32xf32>,
    } else {
    }
    return
  }
  func.func @transform_0(%arg0: i32, %arg1: i32, %arg2: i32) -> (i32, i32) {
    %c0_i32 = arith.constant 0 : i32
    return %arg0, %arg2 : i32, i32
  }
  func.func @transform_1(%arg0: i32, %arg1: i32, %arg2: i32) -> (i32, i32) {
    %c0_i32 = arith.constant 0 : i32
    return %arg0, %arg2 : i32, i32
  }
  func.func @transform_2(%arg0: i32, %arg1: i32, %arg2: i32) -> (i32, i32) {
    %c0_i32 = arith.constant 0 : i32
    return %arg1, %arg2 : i32, i32
  }
  func.func @transform_3(%arg0: i32, %arg1: i32, %arg2: i32) -> (i32, i32) {
    %c0_i32 = arith.constant 0 : i32
    return %arg1, %arg2 : i32, i32
  }
  func.func @transform_4(%arg0: i32, %arg1: i32, %arg2: i32) -> (i32, i32) {
    %c0_i32 = arith.constant 0 : i32
    %c0_i32_0 = arith.constant 0 : i32
    return %c0_i32, %arg1 : i32, i32
  }
  func.func @transform_5(%arg0: i32, %arg1: i32, %arg2: i32) -> (i32, i32) {
    %c0_i32 = arith.constant 0 : i32
    %c0_i32_0 = arith.constant 0 : i32
    return %c0_i32, %arg1 : i32, i32
  }
  func.func @transform_6(%arg0: i32, %arg1: i32, %arg2: i32) -> (i32, i32) {
    %c0_i32 = arith.constant 0 : i32
    return %arg0, %arg1 : i32, i32
  }
  func.func @transform_7(%arg0: i32, %arg1: i32, %arg2: i32) -> (i32, i32) {
    %c0_i32 = arith.constant 0 : i32
    return %arg0, %arg1 : i32, i32
  }
}

</mosaic_0001>

<llo_original>
// kernel: multi_head_attention_forward.2
$region0: #{multi_head_attention_forward.2}
  #allocation0 [shape = 'u32[]', space=smem, size = 0x4, offset = 0x4, fixed_abs, tag = 'smem constant byte address 0x4 - core index']
  #allocation1 [shape = 'u32[72,128]{1,0:T(1,128)}', space=vmem, size = 0x9000, scoped, tag = 'internal scratch']
  #allocation2 [shape = 'f32[16,32]{1,0:T(8,128)}', space=vmem, size = 0x2000, scoped, tag = 'scratch operand']
  #allocation3 [shape = 'f32[16,32]{1,0:T(8,128)}', space=vmem, size = 0x2000, scoped, tag = 'scratch operand']
  %s0 = inlined_call_operand.vmem [shape: f32[16,32], index: 0, kind: input, shape index: {}]
  %s1 = inlined_call_operand.vmem [shape: f32[16,32], index: 1, kind: input, shape index: {}]
  %s2 = inlined_call_operand.vmem [shape: f32[32,32], index: 2, kind: input, shape index: {}]
  %s3 = inlined_call_operand.vmem [shape: f32[32,32], index: 3, kind: input, shape index: {}]
  %s4 = inlined_call_operand.vmem [shape: f32[1,32], index: 4, kind: input, shape index: {}]
  %s5 = inlined_call_operand.vmem [shape: f32[1,32], index: 5, kind: input, shape index: {}]
  %s6 = inlined_call_operand.vmem [shape: f32[16,32], index: 6, kind: output, shape index: {0}]
  %s7 = inlined_call_operand.vmem [shape: f32[16,32], index: 7, kind: output, shape index: {1}]
  %8 = xla_tuple %s6, %s7
  %s9 = sld [smem:[#allocation0]]
  $region50: #{multi_head_attention_forward.2} parent=0
    _
  %s11 = ssub.s32 1, %s9
  %s12 = scalar_select 0, %s11, %s9
  // Predicated region
  $region2: #{multi_head_attention_forward.2} parent=0 // pred_check
    _
  $region3: #{multi_head_attention_forward.2} parent=0 // pred_check_branch
    %14 = sbr.rel (0) target = $region5
  $region4: #{multi_head_attention_forward.2} parent=0 // pred_region
    _
  $region5: #{multi_head_attention_forward.2} parent=0 // pred_fallthru
    _
  // Predicated region
  $region6: #{multi_head_attention_forward.2} parent=0 // pred_check
    _
  $region7: #{multi_head_attention_forward.2} parent=0 // pred_check_branch
    %16 = sbr.rel (0) target = $region9
  $region8: #{multi_head_attention_forward.2} parent=0 // pred_region
    _
  $region9: #{multi_head_attention_forward.2} parent=0 // pred_fallthru
    _
  // Predicated region
  $region10: #{multi_head_attention_forward.2} parent=0 // pred_check
    _
  $region11: #{multi_head_attention_forward.2} parent=0 // pred_check_branch
    %18 = sbr.rel (0) target = $region13
  $region12: #{multi_head_attention_forward.2} parent=0 // pred_region
    _
  $region13: #{multi_head_attention_forward.2} parent=0 // pred_fallthru
    _
  // Predicated region
  $region14: #{multi_head_attention_forward.2} parent=0 // pred_check
    _
  $region15: #{multi_head_attention_forward.2} parent=0 // pred_check_branch
    %20 = sbr.rel (0) target = $region17
  $region16: #{multi_head_attention_forward.2} parent=0 // pred_region
    _
  $region17: #{multi_head_attention_forward.2} parent=0 // pred_fallthru
    _
  // Predicated region
  $region18: #{multi_head_attention_forward.2} parent=0 // pred_check
    _
  $region19: #{multi_head_attention_forward.2} parent=0 // pred_check_branch
    %22 = sbr.rel (0) target = $region21
  $region20: #{multi_head_attention_forward.2} parent=0 // pred_region
    _
  $region21: #{multi_head_attention_forward.2} parent=0 // pred_fallthru
    _
  // Predicated region
  $region22: #{multi_head_attention_forward.2} parent=0 // pred_check
    _
  $region23: #{multi_head_attention_forward.2} parent=0 // pred_check_branch
    %24 = sbr.rel (0) target = $region25
  $region24: #{multi_head_attention_forward.2} parent=0 // pred_region
    _
  $region25: #{multi_head_attention_forward.2} parent=0 // pred_fallthru
    _
  %p25 = scmp.eq.s32.totalorder 0, 0
  // Predicated region
  $region26: #{multi_head_attention_forward.2} parent=0 // pred_check
    %p26 = pneg %p25
  $region27: #{multi_head_attention_forward.2} parent=0 // pred_check_branch
    %28 = sbr.rel (%p26) target = $region29
  $region28: #{multi_head_attention_forward.2} parent=0 // pred_region
    %vm29 = vcmask 261120
    %30 = vst.msk [vmem:[#allocation2] sm:$0xff] %vm29, 0.0
    %31 = vst.msk [vmem:[#allocation2 + $0x8] sm:$0xff] %vm29, 0.0
    %32 = vst.msk [vmem:[#allocation3] sm:$0xff] %vm29, 0.0
    %33 = vst.msk [vmem:[#allocation3 + $0x8] sm:$0xff] %vm29, 0.0
  $region29: #{multi_head_attention_forward.2} parent=0 // pred_fallthru
    _
  %v34 = vld [vmem:[#allocation2] sm:$0xff]
  %v35 = vld [vmem:[#allocation2 + $0x8] sm:$0xff]
  %v36 = vld [vmem:[%s0] sm:$0xff]
  %v37 = vld [vmem:[%s0 + $0x8] sm:$0xff]
  %v38 = vld [vmem:[%s2] sm:$0xff]
  %v39 = vld [vmem:[%s2 + $0x8] sm:$0xff]
  %v40 = vld [vmem:[%s2 + $0x10] sm:$0xff]
  %v41 = vld [vmem:[%s2 + $0x18] sm:$0xff]
  %vm42 = vcmask 261120
  %v44 = vsel %vm42, %v36, 0
  %v47 = vsel %vm42, %v37, 0
  %v50 = vsel %vm42, %v38, 0
  %v53 = vsel %vm42, %v39, 0
  %v56 = vsel %vm42, %v40, 0
  %v59 = vsel %vm42, %v41, 0
  %61 = vmatpush.xpose.msra.mxu0 0.0
  %62 = vmatpush.xpose.msra.mxu0 0.0
  %63 = vmatpush.xpose.msra.mxu0 0.0
  %64 = vmatpush.xpose.msra.mxu0 0.0
  %65 = vmatpush.xpose.msra.mxu0 0.0
  %66 = vmatpush.xpose.msra.mxu0 0.0
  %67 = vmatpush.xpose.msra.mxu0 0.0
  %68 = vmatpush.xpose.msra.mxu0 0.0
  %69 = vmatpush.xpose.msra.mxu0 0.0
  %70 = vmatpush.xpose.msra.mxu0 0.0
  %71 = vmatpush.xpose.msra.mxu0 0.0
  %72 = vmatpush.xpose.msra.mxu0 0.0
  %73 = vmatpush.xpose.msra.mxu0 %v59
  %74 = vmatpush.xpose.msra.mxu0 %v56
  %75 = vmatpush.xpose.msra.mxu0 %v53
  %76 = vmatpush.xpose.msra.mxu0 %v50
  %77 = vmatmul.f32.gmra.mxu0 %v44
  %v78 = vpop.f32.mrf.mxu0
  %v79 = vadd.f32 0.0, %v78
  %80 = vmatmul.f32.gmra.mxu0 %v47
  %v81 = vpop.f32.mrf.mxu0
  %v82 = vadd.f32 0.0, %v81
  %83 = vdwg.mxu0
  %v84 = vadd.f32 %v34, %v79
  %v85 = vadd.f32 %v35, %v82
  %86 = vst.msk [vmem:[#allocation2] sm:$0xff] %vm42, %v84
  %87 = vst.msk [vmem:[#allocation2 + $0x8] sm:$0xff] %vm42, %v85
  %v88 = vld [vmem:[#allocation3] sm:$0xff]
  %v89 = vld [vmem:[#allocation3 + $0x8] sm:$0xff]
  %v90 = vld [vmem:[%s1] sm:$0xff]
  %v91 = vld [vmem:[%s1 + $0x8] sm:$0xff]
  %v92 = vld [vmem:[%s3] sm:$0xff]
  %v93 = vld [vmem:[%s3 + $0x8] sm:$0xff]
  %v94 = vld [vmem:[%s3 + $0x10] sm:$0xff]
  %v95 = vld [vmem:[%s3 + $0x18] sm:$0xff]
  %v97 = vsel %vm42, %v90, 0
  %v100 = vsel %vm42, %v91, 0
  %v103 = vsel %vm42, %v92, 0
  %v106 = vsel %vm42, %v93, 0
  %v109 = vsel %vm42, %v94, 0
  %v112 = vsel %vm42, %v95, 0
  %114 = vmatpush.xpose.msra.mxu0 0.0
  %115 = vmatpush.xpose.msra.mxu0 0.0
  %116 = vmatpush.xpose.msra.mxu0 0.0
  %117 = vmatpush.xpose.msra.mxu0 0.0
  %118 = vmatpush.xpose.msra.mxu0 0.0
  %119 = vmatpush.xpose.msra.mxu0 0.0
  %120 = vmatpush.xpose.msra.mxu0 0.0
  %121 = vmatpush.xpose.msra.mxu0 0.0
  %122 = vmatpush.xpose.msra.mxu0 0.0
  %123 = vmatpush.xpose.msra.mxu0 0.0
  %124 = vmatpush.xpose.msra.mxu0 0.0
  %125 = vmatpush.xpose.msra.mxu0 0.0
  %126 = vmatpush.xpose.msra.mxu0 %v112
  %127 = vmatpush.xpose.msra.mxu0 %v109
  %128 = vmatpush.xpose.msra.mxu0 %v106
  %129 = vmatpush.xpose.msra.mxu0 %v103
  %130 = vmatmul.f32.gmra.mxu0 %v97
  %v131 = vpop.f32.mrf.mxu0
  %v132 = vadd.f32 0.0, %v131
  %133 = vmatmul.f32.gmra.mxu0 %v100
  %v134 = vpop.f32.mrf.mxu0
  %v135 = vadd.f32 0.0, %v134
  %136 = vdwg.mxu0
  %v137 = vadd.f32 %v88, %v132
  %v138 = vadd.f32 %v89, %v135
  %139 = vst.msk [vmem:[#allocation3] sm:$0xff] %vm42, %v137
  %140 = vst.msk [vmem:[#allocation3 + $0x8] sm:$0xff] %vm42, %v138
  // Predicated region
  $region30: #{multi_head_attention_forward.2} parent=0 // pred_check
    %p141 = pneg %p25
  $region31: #{multi_head_attention_forward.2} parent=0 // pred_check_branch
    %143 = sbr.rel (%p141) target = $region33
  $region32: #{multi_head_attention_forward.2} parent=0 // pred_region
    %v144 = vld [vmem:[#allocation2] sm:$0xff]
    %v145 = vld [vmem:[#allocation2 + $0x8] sm:$0xff]
    %v146 = vld [vmem:[%s4] sm:$0x1]
    %v148 = vperm.slane %v146, 0
    %v150 = vadd.f32 %v144, %v148
    %v151 = vadd.f32 %v145, %v148
    %152 = vst.msk [vmem:[%s6] sm:$0xff] %vm42, %v150
    %153 = vst.msk [vmem:[%s6 + $0x8] sm:$0xff] %vm42, %v151
    %v154 = vld [vmem:[#allocation3] sm:$0xff]
    %v155 = vld [vmem:[#allocation3 + $0x8] sm:$0xff]
    %v156 = vld [vmem:[%s5] sm:$0x1]
    %v158 = vperm.slane %v156, 0
    %v160 = vadd.f32 %v154, %v158
    %v161 = vadd.f32 %v155, %v158
    %162 = vst.msk [vmem:[%s7] sm:$0xff] %vm42, %v160
    %163 = vst.msk [vmem:[%s7 + $0x8] sm:$0xff] %vm42, %v161
  $region33: #{multi_head_attention_forward.2} parent=0 // pred_fallthru
    _
  // Predicated region
  $region34: #{multi_head_attention_forward.2} parent=0 // pred_check
    _
  $region35: #{multi_head_attention_forward.2} parent=0 // pred_check_branch
    %165 = sbr.rel (0) target = $region37
  $region36: #{multi_head_attention_forward.2} parent=0 // pred_region
    _
  $region37: #{multi_head_attention_forward.2} parent=0 // pred_fallthru
    _
  // Predicated region
  $region38: #{multi_head_attention_forward.2} parent=0 // pred_check
    _
  $region39: #{multi_head_attention_forward.2} parent=0 // pred_check_branch
    %167 = sbr.rel (0) target = $region41
  $region40: #{multi_head_attention_forward.2} parent=0 // pred_region
    _
  $region41: #{multi_head_attention_forward.2} parent=0 // pred_fallthru
    _
  // Predicated region
  $region42: #{multi_head_attention_forward.2} parent=0 // pred_check
    _
  $region43: #{multi_head_attention_forward.2} parent=0 // pred_check_branch
    %169 = sbr.rel (0) target = $region45
  $region44: #{multi_head_attention_forward.2} parent=0 // pred_region
    _
  $region45: #{multi_head_attention_forward.2} parent=0 // pred_fallthru
    _
  // Predicated region
  $region46: #{multi_head_attention_forward.2} parent=0 // pred_check
    _
  $region47: #{multi_head_attention_forward.2} parent=0 // pred_check_branch
    %171 = sbr.rel (0) target = $region49
  $region48: #{multi_head_attention_forward.2} parent=0 // pred_region
    _
  $region49: #{multi_head_attention_forward.2} parent=0 // pred_fallthru
    _

// kernel: multi_head_attention_forward.3
$region0: #{multi_head_attention_forward.3}
  #allocation0 [shape = 'u32[]', space=smem, size = 0x4, offset = 0x4, fixed_abs, tag = 'smem constant byte address 0x4 - core index']
  #allocation1 [shape = 'u32[72,128]{1,0:T(1,128)}', space=vmem, size = 0x9000, scoped, tag = 'internal scratch']
  %s0 = inlined_call_operand.vmem [shape: f32[2,8,32], index: 0, kind: input, shape index: {}]
  %s1 = inlined_call_operand.vmem [shape: f32[2,8,32], index: 1, kind: input, shape index: {}]
  %s2 = inlined_call_operand.vmem [shape: f32[2,8,32], index: 2, kind: input, shape index: {}]
  %s3 = inlined_call_operand.hbm [shape: f32[32,32], index: 3, kind: input, shape index: {}]
  %s4 = inlined_call_operand.vmem [shape: f32[1,32], index: 4, kind: input, shape index: {}]
  %s5 = inlined_call_operand.hbm [shape: f32[32,32], index: 5, kind: input, shape index: {}]
  %s6 = inlined_call_operand.vmem [shape: f32[1,32], index: 6, kind: input, shape index: {}]
  %s7 = inlined_call_operand.vmem [shape: f32[2,8,32], index: 7, kind: output, shape index: {0}]
  %s8 = inlined_call_operand.hbm [shape: f32[2,8,8], index: 8, kind: output, shape index: {1}]
  %9 = xla_tuple %s7, %s8
  %s10 = sld [smem:[#allocation0]]
  $region77: #{multi_head_attention_forward.3} parent=0
    _
  %s12 = ssub.s32 1, %s10
  %s13 = scalar_select 0, %s12, %s10
  $region1: #{multi_head_attention_forward.3} parent=0
    #allocation2 [shape = 'u8[16384]{0}', space=vmem, size = 0x4000, scoped, tag = 'input window, operand 3, single buffered']
    #allocation3 [shape = 's32[2]{0}', space=sflag, size = 0x8, scoped, tag = 'scoped memory for multi_head_attention_forward.3']
    #allocation4 [shape = 's32[2]{0}', space=sflag, size = 0x8, scoped, tag = 'scoped memory for multi_head_attention_forward.3']
    #allocation5 [shape = 'u8[16384]{0}', space=vmem, size = 0x4000, scoped, tag = 'input window, operand 5, single buffered']
    #allocation6 [shape = 's32[1]{0}', space=sflag, size = 0x4, scoped, tag = 'scoped memory for multi_head_attention_forward.3']
    #allocation7 [shape = 'u8[8192]{0}', space=vmem, size = 0x2000, scoped, tag = 'output window, operand 1']
    %14 = vsyncpa [#allocation3], 0
    %15 = vsyncpa [#allocation6], 0
    %16 = vsyncpa [#allocation4], 0
    %s17 = scalar_lea.sflag [#allocation4], 1
    %18 = vsyncpa %s17, 0
    loop: start=0, step=1, limit=4
    $region2: #{multi_head_attention_forward.3} parent=1 // loop_pre_header
      _
    $region3: #{multi_head_attention_forward.3} parent=1 // loop_header
      %s20 = sphi 0, %s24
      %p21 = scmp.ge.s32.totalorder %s20, 4
      %s27 = sphi 0, %s39
      %s28 = sphi 0, %s35
      %s29 = sphi 0, %s27
      %s30 = sphi 0, %s28
      %s31 = sphi 0, %s29
      %s32 = sphi 0, %s30
      %s44 = sphi 0, %s46
      %s47 = sphi 0, %s44
      %s48 = sphi 0, %s47
      %s64 = sphi 0, %s48
      %s70 = sphi 0, %s72
      %s73 = sphi 0, %s70
      %s74 = sphi 0, %s73
      %s90 = sphi 0, %s74
      %s96 = sphi 0, %s98
      %s99 = sphi 0, %s96
      %s100 = sphi 0, %s99
      %s116 = sphi 0, %s100
      %s120 = sphi 0, %s120
      %s122 = sphi 0, %s120
      %s123 = sphi 0, %s122
      %s137 = sphi 0, %s123
      %s141 = sphi 0, %s141
      %s143 = sphi 0, %s141
      %s144 = sphi 0, %s143
      %s158 = sphi 0, %s144
      %s162 = sphi 0, %s162
      %s164 = sphi 0, %s162
      %s165 = sphi 0, %s164
      %s179 = sphi 0, %s165
      %s183 = sphi 0, %s183
      %s185 = sphi 0, %s183
      %s186 = sphi 0, %s185
      %s200 = sphi 0, %s186
      %s208 = sphi 0, %s210
      %s211 = sphi 0, %s208
      %s212 = sphi 0, %s211
      %s228 = sphi 0, %s212
      %s236 = sphi 0, %s238
      %s239 = sphi 0, %s236
      %s240 = sphi 0, %s239
      %s256 = sphi 0, %s240
    $region4: #{multi_head_attention_forward.3} parent=1 // loop_header_branch
      %23 = sbr.rel (%p21) target = $region8
    $region5: #{multi_head_attention_forward.3} parent=1 // loop_body
      %s25 = ssub.s32 %s20, 1
      %s26 = ssub.s32 %s20, 2
      %s33 = sadd.s32 1, %s28
      %p34 = scmp.ge.s32.totalorder %s33, 1
      %s35 = scalar_select %p34, 0, %s33
      %s36 = sadd.s32 1, %s27
      %s37 = scalar_select %p34, %s36, %s27
      %p38 = scmp.ge.s32.totalorder %s37, 2
      %s39 = scalar_select %p38, 0, %s37
      %s40 = ssub.s32 %s27, %s39
      %s41 = ssub.s32 %s28, %s35
      %s42 = sor.u32 %s40, %s41
      %p43 = scmp.eq.s32.totalorder %s42, 0
      %s45 = sadd.s32 %s44, 1
      %s46 = scalar_select %p43, %s44, %s45
      %p49 = pneg %p43
      %p50 = scmp.eq.s32.totalorder %s20, 1
      %p51 = por %p49, %p50
      %p52 = scmp.ne.s32.totalorder %s44, %s47
      %p53 = scmp.eq.s32.totalorder %s20, 0
      %p54 = por %p52, %p53
      %p55 = scmp.ne.s32.totalorder %s44, %s47
      %p56 = scmp.eq.s32.totalorder %s25, 1
      %p57 = por %p55, %p56
      %p58 = scmp.ne.s32.totalorder %s47, %s48
      %p59 = scmp.eq.s32.totalorder %s25, 0
      %p60 = por %p58, %p59
      %p61 = scmp.ne.s32.totalorder %s47, %s48
      %p62 = scmp.eq.s32.totalorder %s26, 1
      %p63 = por %p61, %p62
      %p65 = scmp.ne.s32.totalorder %s48, %s64
      %p66 = scmp.eq.s32.totalorder %s26, 0
      %p67 = por %p65, %p66
      %s68 = ssub.s32 %s27, %s39
      %p69 = scmp.eq.s32.totalorder %s68, 0
      %s71 = sadd.s32 %s70, 1
      %s72 = scalar_select %p69, %s70, %s71
      %p75 = pneg %p69
      %p76 = scmp.eq.s32.totalorder %s20, 1
      %p77 = por %p75, %p76
      %p78 = scmp.ne.s32.totalorder %s70, %s73
      %p79 = scmp.eq.s32.totalorder %s20, 0
      %p80 = por %p78, %p79
      %p81 = scmp.ne.s32.totalorder %s70, %s73
      %p82 = scmp.eq.s32.totalorder %s25, 1
      %p83 = por %p81, %p82
      %p84 = scmp.ne.s32.totalorder %s73, %s74
      %p85 = scmp.eq.s32.totalorder %s25, 0
      %p86 = por %p84, %p85
      %p87 = scmp.ne.s32.totalorder %s73, %s74
      %p88 = scmp.eq.s32.totalorder %s26, 1
      %p89 = por %p87, %p88
      %p91 = scmp.ne.s32.totalorder %s74, %s90
      %p92 = scmp.eq.s32.totalorder %s26, 0
      %p93 = por %p91, %p92
      %s94 = ssub.s32 %s27, %s39
      %p95 = scmp.eq.s32.totalorder %s94, 0
      %s97 = sadd.s32 %s96, 1
      %s98 = scalar_select %p95, %s96, %s97
      %p101 = pneg %p95
      %p102 = scmp.eq.s32.totalorder %s20, 1
      %p103 = por %p101, %p102
      %p104 = scmp.ne.s32.totalorder %s96, %s99
      %p105 = scmp.eq.s32.totalorder %s20, 0
      %p106 = por %p104, %p105
      %p107 = scmp.ne.s32.totalorder %s96, %s99
      %p108 = scmp.eq.s32.totalorder %s25, 1
      %p109 = por %p107, %p108
      %p110 = scmp.ne.s32.totalorder %s99, %s100
      %p111 = scmp.eq.s32.totalorder %s25, 0
      %p112 = por %p110, %p111
      %p113 = scmp.ne.s32.totalorder %s99, %s100
      %p114 = scmp.eq.s32.totalorder %s26, 1
      %p115 = por %p113, %p114
      %p117 = scmp.ne.s32.totalorder %s100, %s116
      %p118 = scmp.eq.s32.totalorder %s26, 0
      %p119 = por %p117, %p118
      %s121 = sadd.s32 %s120, 1
      %p124 = scmp.eq.s32.totalorder %s20, 1
      %p125 = scmp.ne.s32.totalorder %s120, %s122
      %p126 = scmp.eq.s32.totalorder %s20, 0
      %p127 = por %p125, %p126
      %p128 = scmp.ne.s32.totalorder %s120, %s122
      %p129 = scmp.eq.s32.totalorder %s25, 1
      %p130 = por %p128, %p129
      %p131 = scmp.ne.s32.totalorder %s122, %s123
      %p132 = scmp.eq.s32.totalorder %s25, 0
      %p133 = por %p131, %p132
      %p134 = scmp.ne.s32.totalorder %s122, %s123
      %p135 = scmp.eq.s32.totalorder %s26, 1
      %p136 = por %p134, %p135
      %p138 = scmp.ne.s32.totalorder %s123, %s137
      %p139 = scmp.eq.s32.totalorder %s26, 0
      %p140 = por %p138, %p139
      %s142 = sadd.s32 %s141, 1
      %p145 = scmp.eq.s32.totalorder %s20, 1
      %p146 = scmp.ne.s32.totalorder %s141, %s143
      %p147 = scmp.eq.s32.totalorder %s20, 0
      %p148 = por %p146, %p147
      %p149 = scmp.ne.s32.totalorder %s141, %s143
      %p150 = scmp.eq.s32.totalorder %s25, 1
      %p151 = por %p149, %p150
      %p152 = scmp.ne.s32.totalorder %s143, %s144
      %p153 = scmp.eq.s32.totalorder %s25, 0
      %p154 = por %p152, %p153
      %p155 = scmp.ne.s32.totalorder %s143, %s144
      %p156 = scmp.eq.s32.totalorder %s26, 1
      %p157 = por %p155, %p156
      %p159 = scmp.ne.s32.totalorder %s144, %s158
      %p160 = scmp.eq.s32.totalorder %s26, 0
      %p161 = por %p159, %p160
      %s163 = sadd.s32 %s162, 1
      %p166 = scmp.eq.s32.totalorder %s20, 1
      %p167 = scmp.ne.s32.totalorder %s162, %s164
      %p168 = scmp.eq.s32.totalorder %s20, 0
      %p169 = por %p167, %p168
      %p170 = scmp.ne.s32.totalorder %s162, %s164
      %p171 = scmp.eq.s32.totalorder %s25, 1
      %p172 = por %p170, %p171
      %p173 = scmp.ne.s32.totalorder %s164, %s165
      %p174 = scmp.eq.s32.totalorder %s25, 0
      %p175 = por %p173, %p174
      %p176 = scmp.ne.s32.totalorder %s164, %s165
      %p177 = scmp.eq.s32.totalorder %s26, 1
      %p178 = por %p176, %p177
      %p180 = scmp.ne.s32.totalorder %s165, %s179
      %p181 = scmp.eq.s32.totalorder %s26, 0
      %p182 = por %p180, %p181
      %s184 = sadd.s32 %s183, 1
      %p187 = scmp.eq.s32.totalorder %s20, 1
      %p188 = scmp.ne.s32.totalorder %s183, %s185
      %p189 = scmp.eq.s32.totalorder %s20, 0
      %p190 = por %p188, %p189
      %p191 = scmp.ne.s32.totalorder %s183, %s185
      %p192 = scmp.eq.s32.totalorder %s25, 1
      %p193 = por %p191, %p192
      %p194 = scmp.ne.s32.totalorder %s185, %s186
      %p195 = scmp.eq.s32.totalorder %s25, 0
      %p196 = por %p194, %p195
      %p197 = scmp.ne.s32.totalorder %s185, %s186
      %p198 = scmp.eq.s32.totalorder %s26, 1
      %p199 = por %p197, %p198
      %p201 = scmp.ne.s32.totalorder %s186, %s200
      %p202 = scmp.eq.s32.totalorder %s26, 0
      %p203 = por %p201, %p202
      %s204 = ssub.s32 %s27, %s39
      %s205 = ssub.s32 %s28, %s35
      %s206 = sor.u32 %s204, %s205
      %p207 = scmp.eq.s32.totalorder %s206, 0
      %s209 = sadd.s32 %s208, 1
      %s210 = scalar_select %p207, %s208, %s209
      %p213 = pneg %p207
      %p214 = scmp.eq.s32.totalorder %s20, 1
      %p215 = por %p213, %p214
      %p216 = scmp.ne.s32.totalorder %s208, %s211
      %p217 = scmp.eq.s32.totalorder %s20, 0
      %p218 = por %p216, %p217
      %p219 = scmp.ne.s32.totalorder %s208, %s211
      %p220 = scmp.eq.s32.totalorder %s25, 1
      %p221 = por %p219, %p220
      %p222 = scmp.ne.s32.totalorder %s211, %s212
      %p223 = scmp.eq.s32.totalorder %s25, 0
      %p224 = por %p222, %p223
      %p225 = scmp.ne.s32.totalorder %s211, %s212
      %p226 = scmp.eq.s32.totalorder %s26, 1
      %p227 = por %p225, %p226
      %p229 = scmp.ne.s32.totalorder %s212, %s228
      %p230 = scmp.eq.s32.totalorder %s26, 0
      %p231 = por %p229, %p230
      %s232 = ssub.s32 %s27, %s39
      %s233 = ssub.s32 %s28, %s35
      %s234 = sor.u32 %s232, %s233
      %p235 = scmp.eq.s32.totalorder %s234, 0
      %s237 = sadd.s32 %s236, 1
      %s238 = scalar_select %p235, %s236, %s237
      %p241 = pneg %p235
      %p242 = scmp.eq.s32.totalorder %s20, 1
      %p243 = por %p241, %p242
      %p244 = scmp.ne.s32.totalorder %s236, %s239
      %p245 = scmp.eq.s32.totalorder %s20, 0
      %p246 = por %p244, %p245
      %p247 = scmp.ne.s32.totalorder %s236, %s239
      %p248 = scmp.eq.s32.totalorder %s25, 1
      %p249 = por %p247, %p248
      %p250 = scmp.ne.s32.totalorder %s239, %s240
      %p251 = scmp.eq.s32.totalorder %s25, 0
      %p252 = por %p250, %p251
      %p253 = scmp.ne.s32.totalorder %s239, %s240
      %p254 = scmp.eq.s32.totalorder %s26, 1
      %p255 = por %p253, %p254
      %p257 = scmp.ne.s32.totalorder %s240, %s256
      %p258 = scmp.eq.s32.totalorder %s26, 0
      %p259 = por %p257, %p258
      %p260 = scmp.le.s32.totalorder 1, %s20
      %p261 = scmp.lt.s32.totalorder %s20, 3
      %p262 = pnand %p260, %p261
      %p263 = pneg %p262
      // Predicated region
      $region9: #{multi_head_attention_forward.3} parent=5 // pred_check
        _
      $region10: #{multi_head_attention_forward.3} parent=5 // pred_check_branch
        %265 = sbr.rel (%p262) target = $region12
      $region11: #{multi_head_attention_forward.3} parent=5 // pred_region
        %s266 = ssub.s32 %s20, 1
        // Predicated region
        $region13: #{multi_head_attention_forward.3} parent=11 // pred_check
          %p267 = pneg %p133
        $region14: #{multi_head_attention_forward.3} parent=11 // pred_check_branch
          %269 = sbr.rel (%p267) target = $region16
        $region15: #{multi_head_attention_forward.3} parent=11 // pred_region
          %271 = vsyncadd [#allocation3], 0
          %s272 = sshll.u32 %s3, 4
          %s273 = int_to_ptr.hbm [resolvable:$true] %s272
          %s274 = sshll.u32 [#allocation2], 4
          %s275 = int_to_ptr.vmem [resolvable:$true] %s274
          %280 = dma.hbm_to_vmem [thread:$0]  %s273, 512, %s275, [#allocation3], 128, 128, 8
        $region16: #{multi_head_attention_forward.3} parent=11 // pred_fallthru
          _
        // Predicated region
        $region17: #{multi_head_attention_forward.3} parent=11 // pred_check
          %p281 = pneg %p154
        $region18: #{multi_head_attention_forward.3} parent=11 // pred_check_branch
          %283 = sbr.rel (%p281) target = $region20
        $region19: #{multi_head_attention_forward.3} parent=11 // pred_region
          _
        $region20: #{multi_head_attention_forward.3} parent=11 // pred_fallthru
          _
        // Predicated region
        $region21: #{multi_head_attention_forward.3} parent=11 // pred_check
          %p284 = pneg %p175
        $region22: #{multi_head_attention_forward.3} parent=11 // pred_check_branch
          %286 = sbr.rel (%p284) target = $region24
        $region23: #{multi_head_attention_forward.3} parent=11 // pred_region
          %288 = vsyncadd [#allocation6], 0
          %s289 = sshll.u32 %s5, 4
          %s290 = int_to_ptr.hbm [resolvable:$true] %s289
          %s291 = sshll.u32 [#allocation5], 4
          %s292 = int_to_ptr.vmem [resolvable:$true] %s291
          %297 = dma.hbm_to_vmem [thread:$0]  %s290, 512, %s292, [#allocation6], 128, 128, 8
        $region24: #{multi_head_attention_forward.3} parent=11 // pred_fallthru
          _
        // Predicated region
        $region25: #{multi_head_attention_forward.3} parent=11 // pred_check
          %p298 = pneg %p196
        $region26: #{multi_head_attention_forward.3} parent=11 // pred_check_branch
          %300 = sbr.rel (%p298) target = $region28
        $region27: #{multi_head_attention_forward.3} parent=11 // pred_region
          _
        $region28: #{multi_head_attention_forward.3} parent=11 // pred_fallthru
          _
      $region12: #{multi_head_attention_forward.3} parent=5 // pred_fallthru
        _
      %p301 = scmp.lt.s32.totalorder %s20, 2
      // Predicated region
      $region29: #{multi_head_attention_forward.3} parent=5 // pred_check
        %p302 = pneg %p301
      $region30: #{multi_head_attention_forward.3} parent=5 // pred_check_branch
        %304 = sbr.rel (%p302) target = $region32
      $region31: #{multi_head_attention_forward.3} parent=5 // pred_region
        // Predicated region
        $region33: #{multi_head_attention_forward.3} parent=31 // pred_check
          %p305 = pneg %p54
        $region34: #{multi_head_attention_forward.3} parent=31 // pred_check_branch
          %307 = sbr.rel (%p305) target = $region36
        $region35: #{multi_head_attention_forward.3} parent=31 // pred_region
          %p308 = scmp.lt.s32.totalorder %s27, 1
          %s309 = scalar_select %p308, %s27, 1
          %p310 = scmp.lt.s32.totalorder %s28, 0
          %s311 = scalar_select %p310, %s28, 0
          %s312 = sadd.s32 %s311, %s309
          %s313 = smul.addr %s312, 8
          %s314 = scalar_lea.vmem %s0, %s313
        $region36: #{multi_head_attention_forward.3} parent=31 // pred_fallthru
          _
        // Predicated region
        $region37: #{multi_head_attention_forward.3} parent=31 // pred_check
          %p315 = pneg %p80
        $region38: #{multi_head_attention_forward.3} parent=31 // pred_check_branch
          %317 = sbr.rel (%p315) target = $region40
        $region39: #{multi_head_attention_forward.3} parent=31 // pred_region
          %p318 = scmp.lt.s32.totalorder %s27, 1
          %s319 = scalar_select %p318, %s27, 1
          %s320 = smul.addr %s319, 8
          %s321 = scalar_lea.vmem %s1, %s320
        $region40: #{multi_head_attention_forward.3} parent=31 // pred_fallthru
          _
        // Predicated region
        $region41: #{multi_head_attention_forward.3} parent=31 // pred_check
          %p322 = pneg %p106
        $region42: #{multi_head_attention_forward.3} parent=31 // pred_check_branch
          %324 = sbr.rel (%p322) target = $region44
        $region43: #{multi_head_attention_forward.3} parent=31 // pred_region
          %p325 = scmp.lt.s32.totalorder %s27, 1
          %s326 = scalar_select %p325, %s27, 1
          %s327 = smul.addr %s326, 8
          %s328 = scalar_lea.vmem %s2, %s327
        $region44: #{multi_head_attention_forward.3} parent=31 // pred_fallthru
          _
      $region32: #{multi_head_attention_forward.3} parent=5 // pred_fallthru
        _
      %p329 = scmp.le.s32.totalorder 1, %s20
      %p330 = scmp.lt.s32.totalorder %s20, 3
      %p331 = pnand %p329, %p330
      %p332 = pneg %p331
      // Predicated region
      $region45: #{multi_head_attention_forward.3} parent=5 // pred_check
        _
      $region46: #{multi_head_attention_forward.3} parent=5 // pred_check_branch
        %334 = sbr.rel (%p331) target = $region48
      $region47: #{multi_head_attention_forward.3} parent=5 // pred_region
        %s335 = ssub.s32 %s20, 1
        // Predicated region
        $region49: #{multi_head_attention_forward.3} parent=47 // pred_check
          %p336 = pneg %p133
        $region50: #{multi_head_attention_forward.3} parent=47 // pred_check_branch
          %338 = sbr.rel (%p336) target = $region52
        $region51: #{multi_head_attention_forward.3} parent=47 // pred_region
          %340 = dma.done [#allocation3], 512
        $region52: #{multi_head_attention_forward.3} parent=47 // pred_fallthru
          _
        // Predicated region
        $region53: #{multi_head_attention_forward.3} parent=47 // pred_check
          %p341 = pneg %p175
        $region54: #{multi_head_attention_forward.3} parent=47 // pred_check_branch
          %343 = sbr.rel (%p341) target = $region56
        $region55: #{multi_head_attention_forward.3} parent=47 // pred_region
          %345 = dma.done [#allocation6], 512
        $region56: #{multi_head_attention_forward.3} parent=47 // pred_fallthru
          _
        %p346 = scmp.lt.s32.totalorder %s29, 1
        %s347 = scalar_select %p346, %s29, 1
        %p348 = scmp.lt.s32.totalorder %s30, 0
        %s349 = scalar_select %p348, %s30, 0
        %s350 = sadd.s32 %s349, %s347
        %s351 = smul.addr %s350, 8
        %s352 = scalar_lea.vmem %s0, %s351
        %p353 = pneg %p60
        %p354 = pneg %p57
        %p355 = scmp.lt.s32.totalorder %s29, 1
        %s356 = scalar_select %p355, %s29, 1
        %s357 = smul.addr %s356, 8
        %s358 = scalar_lea.vmem %s1, %s357
        %p359 = pneg %p86
        %p360 = pneg %p83
        %p361 = scmp.lt.s32.totalorder %s29, 1
        %s362 = scalar_select %p361, %s29, 1
        %s363 = smul.addr %s362, 8
        %s364 = scalar_lea.vmem %s2, %s363
        %p365 = pneg %p112
        %p366 = pneg %p109
        %p367 = pneg %p133
        %p368 = pneg %p130
        %p369 = pneg %p154
        %p370 = pneg %p151
        %p371 = pneg %p175
        %p372 = pneg %p172
        %p373 = pneg %p196
        %p374 = pneg %p193
        %p375 = pneg %p224
        %p376 = pneg %p221
        %p377 = scmp.lt.s32.totalorder %s29, 1
        %s378 = scalar_select %p377, %s29, 1
        %p379 = scmp.lt.s32.totalorder %s30, 0
        %s380 = scalar_select %p379, %s30, 0
        %s381 = sadd.s32 %s380, %s378
        %s382 = smul.addr %s381, 8
        %s383 = scalar_lea.vmem %s7, %s382
        %p384 = pneg %p252
        %p385 = pneg %p249
        %s386 = sand.u32 %s239, 1
        %s387 = scalar_lea.sflag [#allocation4], %s386
        %s388 = sand.u32 %s239, 1
        %s389 = smul.addr %s388, 8
        %s390 = scalar_lea.vmem [#allocation7], %s389
        %p391 = scmp.lt.s32.totalorder %s29, 1
        %s392 = scalar_select %p391, %s29, 1
        %p393 = scmp.lt.s32.totalorder %s30, 0
        %s394 = scalar_select %p393, %s30, 0
        %s395 = sadd.s32 %s394, %s392
        %s396 = smul.addr %s395, 8
        %s397 = scalar_lea.vmem %s0, %s396
        %p398 = scmp.lt.s32.totalorder %s29, 1
        %s399 = scalar_select %p398, %s29, 1
        %s400 = smul.addr %s399, 8
        %s401 = scalar_lea.vmem %s1, %s400
        %p402 = scmp.lt.s32.totalorder %s29, 1
        %s403 = scalar_select %p402, %s29, 1
        %s404 = smul.addr %s403, 8
        %s405 = scalar_lea.vmem %s2, %s404
        %p406 = scmp.lt.s32.totalorder %s29, 1
        %s407 = scalar_select %p406, %s29, 1
        %p408 = scmp.lt.s32.totalorder %s30, 0
        %s409 = scalar_select %p408, %s30, 0
        %s410 = sadd.s32 %s409, %s407
        %s411 = smul.addr %s410, 8
        %s412 = scalar_lea.vmem %s7, %s411
        %v413 = vld [vmem:[%s397] sm:$0xff]
        %v414 = vld [vmem:[#allocation2] sm:$0xff]
        %v415 = vld [vmem:[#allocation2 + $0x8] sm:$0xff]
        %v416 = vld [vmem:[#allocation2 + $0x10] sm:$0xff]
        %v417 = vld [vmem:[#allocation2 + $0x18] sm:$0xff]
        %v418 = vld [vmem:[%s4] sm:$0x1]
        %v420 = vperm.slane %v418, 0
        %vm422 = vcmask 261120
        %v424 = vsel %vm422, %v413, 0
        %v427 = vsel %vm422, %v414, 0
        %v430 = vsel %vm422, %v415, 0
        %v433 = vsel %vm422, %v416, 0
        %v436 = vsel %vm422, %v417, 0
        %438 = vmatpush.xpose.msra.mxu0 0.0
        %439 = vmatpush.xpose.msra.mxu0 0.0
        %440 = vmatpush.xpose.msra.mxu0 0.0
        %441 = vmatpush.xpose.msra.mxu0 0.0
        %442 = vmatpush.xpose.msra.mxu0 0.0
        %443 = vmatpush.xpose.msra.mxu0 0.0
        %444 = vmatpush.xpose.msra.mxu0 0.0
        %445 = vmatpush.xpose.msra.mxu0 0.0
        %446 = vmatpush.xpose.msra.mxu0 0.0
        %447 = vmatpush.xpose.msra.mxu0 0.0
        %448 = vmatpush.xpose.msra.mxu0 0.0
        %449 = vmatpush.xpose.msra.mxu0 0.0
        %450 = vmatpush.xpose.msra.mxu0 %v436
        %451 = vmatpush.xpose.msra.mxu0 %v433
        %452 = vmatpush.xpose.msra.mxu0 %v430
        %453 = vmatpush.xpose.msra.mxu0 %v427
        %454 = vmatmul.f32.gmra.mxu0 %v424
        %v455 = vpop.f32.mrf.mxu0
        %v456 = vadd.f32 %v420, %v455
        %457 = vdwg.mxu0
        %v458 = vmul.f32 %v456, 0.35355338
        %v459 = vld [vmem:[%s401] sm:$0xff]
        %v460 = vld [vmem:[%s405] sm:$0xff]
        %v461 = vld [vmem:[#allocation5] sm:$0xff]
        %v462 = vld [vmem:[#allocation5 + $0x8] sm:$0xff]
        %v463 = vld [vmem:[#allocation5 + $0x10] sm:$0xff]
        %v464 = vld [vmem:[#allocation5 + $0x18] sm:$0xff]
        %vm465 = vcmask 64512
        %v467 = vsel %vm465, %v458, 0
        %v470 = vsel %vm465, %v459, 0
        %472 = vmatpush.xpose.msra.mxu0 0.0
        %473 = vmatpush.xpose.msra.mxu0 0.0
        %474 = vmatpush.xpose.msra.mxu0 0.0
        %475 = vmatpush.xpose.msra.mxu0 0.0
        %476 = vmatpush.xpose.msra.mxu0 0.0
        %477 = vmatpush.xpose.msra.mxu0 0.0
        %478 = vmatpush.xpose.msra.mxu0 0.0
        %479 = vmatpush.xpose.msra.mxu0 0.0
        %480 = vmatpush.xpose.msra.mxu0 0.0
        %481 = vmatpush.xpose.msra.mxu0 0.0
        %482 = vmatpush.xpose.msra.mxu0 0.0
        %483 = vmatpush.xpose.msra.mxu0 0.0
        %484 = vmatpush.xpose.msra.mxu0 0.0
        %485 = vmatpush.xpose.msra.mxu0 0.0
        %486 = vmatpush.xpose.msra.mxu0 0.0
        %487 = vmatpush.xpose.msra.mxu0 %v470
        %488 = vmatmul.f32.gmra.mxu0 %v467
        %v489 = vpop.f32.mrf.mxu0
        %v490 = vadd.f32 0.0, %v489
        %491 = vdwg.mxu0
        %v492 = vsel %vm465, %v490, -inf
        %493 = vmax.xlane.f32.xlu0 %v492
        %v494 = vpop.xlane.xlu0 %493
        %v495 = vsub.f32 %v490, %v494
        %v496 = vmul.f32 %v495, 1.442695
        %v497 = vpow.pop %v496
        %v498 = vsel %vm465, %v497, 0.0
        %499 = vadd.xlane.f32.xlu0 %v498
        %v500 = vpop.xlane.xlu0 %499
        %v501 = vrcp.pop %v500
        %v502 = vmul.f32 %v497, %v501
        %v503 = vadd.f32 %v502, 0.0
        %v505 = vsel %vm465, %v502, 0
        %507 = vmatpush.msra.mxu0 0.0
        %508 = vmatpush.msra.mxu0 0.0
        %509 = vmatpush.msra.mxu0 0.0
        %510 = vmatpush.msra.mxu0 0.0
        %511 = vmatpush.msra.mxu0 0.0
        %512 = vmatpush.msra.mxu0 0.0
        %513 = vmatpush.msra.mxu0 0.0
        %514 = vmatpush.msra.mxu0 0.0
        %515 = vmatpush.msra.mxu0 0.0
        %516 = vmatpush.msra.mxu0 0.0
        %517 = vmatpush.msra.mxu0 0.0
        %518 = vmatpush.msra.mxu0 0.0
        %519 = vmatpush.msra.mxu0 0.0
        %520 = vmatpush.msra.mxu0 0.0
        %521 = vmatpush.msra.mxu0 0.0
        %522 = vmatpush.msra.mxu0 %v460
        %523 = vmatmul.f32.gmra.mxu0 %v505
        %v524 = vpop.f32.mrf.mxu0
        %v525 = vadd.f32 0.0, %v524
        %526 = vdwg.mxu0
        %527 = vrot.lane.b32.xlu0 %v458, 120
        %v528 = vpop.permute.xlu0 %527
        %529 = vrot.lane.b32.xlu0 %v459, 120
        %v530 = vpop.permute.xlu0 %529
        %v531 = vsel %vm465, %v528, 0
        %v533 = vsel %vm465, %v530, 0
        %535 = vmatpush.xpose.msra.mxu0 0.0
        %536 = vmatpush.xpose.msra.mxu0 0.0
        %537 = vmatpush.xpose.msra.mxu0 0.0
        %538 = vmatpush.xpose.msra.mxu0 0.0
        %539 = vmatpush.xpose.msra.mxu0 0.0
        %540 = vmatpush.xpose.msra.mxu0 0.0
        %541 = vmatpush.xpose.msra.mxu0 0.0
        %542 = vmatpush.xpose.msra.mxu0 0.0
        %543 = vmatpush.xpose.msra.mxu0 0.0
        %544 = vmatpush.xpose.msra.mxu0 0.0
        %545 = vmatpush.xpose.msra.mxu0 0.0
        %546 = vmatpush.xpose.msra.mxu0 0.0
        %547 = vmatpush.xpose.msra.mxu0 0.0
        %548 = vmatpush.xpose.msra.mxu0 0.0
        %549 = vmatpush.xpose.msra.mxu0 0.0
        %550 = vmatpush.xpose.msra.mxu0 %v533
        %551 = vmatmul.f32.gmra.mxu0 %v531
        %v552 = vpop.f32.mrf.mxu0
        %v553 = vadd.f32 0.0, %v552
        %554 = vdwg.mxu0
        %v555 = vsel %vm465, %v553, -inf
        %556 = vmax.xlane.f32.xlu0 %v555
        %v557 = vpop.xlane.xlu0 %556
        %v558 = vsub.f32 %v553, %v557
        %v559 = vmul.f32 %v558, 1.442695
        %v560 = vpow.pop %v559
        %v561 = vsel %vm465, %v560, 0.0
        %562 = vadd.xlane.f32.xlu0 %v561
        %v563 = vpop.xlane.xlu0 %562
        %v564 = vrcp.pop %v563
        %v565 = vmul.f32 %v560, %v564
        %v566 = vadd.f32 %v503, %v565
        %568 = vrot.lane.b32.xlu0 %v460, 120
        %v569 = vpop.permute.xlu0 %568
        %v572 = vsel %vm465, %v565, 0
        %574 = vmatpush.msra.mxu0 0.0
        %575 = vmatpush.msra.mxu0 0.0
        %576 = vmatpush.msra.mxu0 0.0
        %577 = vmatpush.msra.mxu0 0.0
        %578 = vmatpush.msra.mxu0 0.0
        %579 = vmatpush.msra.mxu0 0.0
        %580 = vmatpush.msra.mxu0 0.0
        %581 = vmatpush.msra.mxu0 0.0
        %582 = vmatpush.msra.mxu0 0.0
        %583 = vmatpush.msra.mxu0 0.0
        %584 = vmatpush.msra.mxu0 0.0
        %585 = vmatpush.msra.mxu0 0.0
        %586 = vmatpush.msra.mxu0 0.0
        %587 = vmatpush.msra.mxu0 0.0
        %588 = vmatpush.msra.mxu0 0.0
        %589 = vmatpush.msra.mxu0 %v569
        %590 = vmatmul.f32.gmra.mxu0 %v572
        %v591 = vpop.f32.mrf.mxu0
        %v592 = vadd.f32 0.0, %v591
        %593 = vdwg.mxu0
        %598 = vrot.lane.b32.xlu0 %v461, 120
        %v599 = vpop.permute.xlu0 %598
        %600 = vrot.lane.b32.xlu0 %v462, 120
        %v601 = vpop.permute.xlu0 %600
        %602 = vrot.lane.b32.xlu0 %v463, 120
        %v603 = vpop.permute.xlu0 %602
        %604 = vrot.lane.b32.xlu0 %v464, 120
        %v605 = vpop.permute.xlu0 %604
        %v607 = vsel %vm465, %v592, 0
        %v609 = vsel %vm465, %v599, 0
        %v611 = vsel %vm465, %v601, 0
        %v613 = vsel %vm465, %v603, 0
        %v615 = vsel %vm465, %v605, 0
        %617 = vmatpush.xpose.msra.mxu0 0.0
        %618 = vmatpush.xpose.msra.mxu0 0.0
        %619 = vmatpush.xpose.msra.mxu0 0.0
        %620 = vmatpush.xpose.msra.mxu0 0.0
        %621 = vmatpush.xpose.msra.mxu0 0.0
        %622 = vmatpush.xpose.msra.mxu0 0.0
        %623 = vmatpush.xpose.msra.mxu0 0.0
        %624 = vmatpush.xpose.msra.mxu0 0.0
        %625 = vmatpush.xpose.msra.mxu0 0.0
        %626 = vmatpush.xpose.msra.mxu0 0.0
        %627 = vmatpush.xpose.msra.mxu0 0.0
        %628 = vmatpush.xpose.msra.mxu0 0.0
        %629 = vmatpush.xpose.msra.mxu0 %v615
        %630 = vmatpush.xpose.msra.mxu0 %v613
        %631 = vmatpush.xpose.msra.mxu0 %v611
        %632 = vmatpush.xpose.msra.mxu0 %v609
        %633 = vmatmul.f32.gmra.mxu0 %v607
        %v634 = vpop.f32.mrf.mxu0
        %v635 = vadd.f32 0.0, %v634
        %636 = vdwg.mxu0
        %v638 = vsel %vm465, %v525, 0
        %v640 = vsel %vm465, %v461, 0
        %v642 = vsel %vm465, %v462, 0
        %v644 = vsel %vm465, %v463, 0
        %v646 = vsel %vm465, %v464, 0
        %648 = vmatpush.xpose.msra.mxu0 0.0
        %649 = vmatpush.xpose.msra.mxu0 0.0
        %650 = vmatpush.xpose.msra.mxu0 0.0
        %651 = vmatpush.xpose.msra.mxu0 0.0
        %652 = vmatpush.xpose.msra.mxu0 0.0
        %653 = vmatpush.xpose.msra.mxu0 0.0
        %654 = vmatpush.xpose.msra.mxu0 0.0
        %655 = vmatpush.xpose.msra.mxu0 0.0
        %656 = vmatpush.xpose.msra.mxu0 0.0
        %657 = vmatpush.xpose.msra.mxu0 0.0
        %658 = vmatpush.xpose.msra.mxu0 0.0
        %659 = vmatpush.xpose.msra.mxu0 0.0
        %660 = vmatpush.xpose.msra.mxu0 %v646
        %661 = vmatpush.xpose.msra.mxu0 %v644
        %662 = vmatpush.xpose.msra.mxu0 %v642
        %663 = vmatpush.xpose.msra.mxu0 %v640
        %664 = vmatmul.f32.gmra.mxu0 %v638
        %v665 = vpop.f32.mrf.mxu0
        %v666 = vadd.f32 %v635, %v665
        %667 = vdwg.mxu0
        %668 = vrot.lane.b32.xlu0 %v458, 112
        %v669 = vpop.permute.xlu0 %668
        %670 = vrot.lane.b32.xlu0 %v459, 112
        %v671 = vpop.permute.xlu0 %670
        %v672 = vsel %vm465, %v669, 0
        %v674 = vsel %vm465, %v671, 0
        %676 = vmatpush.xpose.msra.mxu0 0.0
        %677 = vmatpush.xpose.msra.mxu0 0.0
        %678 = vmatpush.xpose.msra.mxu0 0.0
        %679 = vmatpush.xpose.msra.mxu0 0.0
        %680 = vmatpush.xpose.msra.mxu0 0.0
        %681 = vmatpush.xpose.msra.mxu0 0.0
        %682 = vmatpush.xpose.msra.mxu0 0.0
        %683 = vmatpush.xpose.msra.mxu0 0.0
        %684 = vmatpush.xpose.msra.mxu0 0.0
        %685 = vmatpush.xpose.msra.mxu0 0.0
        %686 = vmatpush.xpose.msra.mxu0 0.0
        %687 = vmatpush.xpose.msra.mxu0 0.0
        %688 = vmatpush.xpose.msra.mxu0 0.0
        %689 = vmatpush.xpose.msra.mxu0 0.0
        %690 = vmatpush.xpose.msra.mxu0 0.0
        %691 = vmatpush.xpose.msra.mxu0 %v674
        %692 = vmatmul.f32.gmra.mxu0 %v672
        %v693 = vpop.f32.mrf.mxu0
        %v694 = vadd.f32 0.0, %v693
        %695 = vdwg.mxu0
        %v696 = vsel %vm465, %v694, -inf
        %697 = vmax.xlane.f32.xlu0 %v696
        %v698 = vpop.xlane.xlu0 %697
        %v699 = vsub.f32 %v694, %v698
        %v700 = vmul.f32 %v699, 1.442695
        %v701 = vpow.pop %v700
        %v702 = vsel %vm465, %v701, 0.0
        %703 = vadd.xlane.f32.xlu0 %v702
        %v704 = vpop.xlane.xlu0 %703
        %v705 = vrcp.pop %v704
        %v706 = vmul.f32 %v701, %v705
        %v707 = vadd.f32 %v566, %v706
        %708 = vrot.lane.b32.xlu0 %v460, 112
        %v709 = vpop.permute.xlu0 %708
        %v712 = vsel %vm465, %v706, 0
        %714 = vmatpush.msra.mxu0 0.0
        %715 = vmatpush.msra.mxu0 0.0
        %716 = vmatpush.msra.mxu0 0.0
        %717 = vmatpush.msra.mxu0 0.0
        %718 = vmatpush.msra.mxu0 0.0
        %719 = vmatpush.msra.mxu0 0.0
        %720 = vmatpush.msra.mxu0 0.0
        %721 = vmatpush.msra.mxu0 0.0
        %722 = vmatpush.msra.mxu0 0.0
        %723 = vmatpush.msra.mxu0 0.0
        %724 = vmatpush.msra.mxu0 0.0
        %725 = vmatpush.msra.mxu0 0.0
        %726 = vmatpush.msra.mxu0 0.0
        %727 = vmatpush.msra.mxu0 0.0
        %728 = vmatpush.msra.mxu0 0.0
        %729 = vmatpush.msra.mxu0 %v709
        %730 = vmatmul.f32.gmra.mxu0 %v712
        %v731 = vpop.f32.mrf.mxu0
        %v732 = vadd.f32 0.0, %v731
        %733 = vdwg.mxu0
        %734 = vrot.lane.b32.xlu0 %v461, 112
        %v735 = vpop.permute.xlu0 %734
        %736 = vrot.lane.b32.xlu0 %v462, 112
        %v737 = vpop.permute.xlu0 %736
        %738 = vrot.lane.b32.xlu0 %v463, 112
        %v739 = vpop.permute.xlu0 %738
        %740 = vrot.lane.b32.xlu0 %v464, 112
        %v741 = vpop.permute.xlu0 %740
        %v743 = vsel %vm465, %v732, 0
        %v745 = vsel %vm465, %v735, 0
        %v747 = vsel %vm465, %v737, 0
        %v749 = vsel %vm465, %v739, 0
        %v751 = vsel %vm465, %v741, 0
        %753 = vmatpush.xpose.msra.mxu0 0.0
        %754 = vmatpush.xpose.msra.mxu0 0.0
        %755 = vmatpush.xpose.msra.mxu0 0.0
        %756 = vmatpush.xpose.msra.mxu0 0.0
        %757 = vmatpush.xpose.msra.mxu0 0.0
        %758 = vmatpush.xpose.msra.mxu0 0.0
        %759 = vmatpush.xpose.msra.mxu0 0.0
        %760 = vmatpush.xpose.msra.mxu0 0.0
        %761 = vmatpush.xpose.msra.mxu0 0.0
        %762 = vmatpush.xpose.msra.mxu0 0.0
        %763 = vmatpush.xpose.msra.mxu0 0.0
        %764 = vmatpush.xpose.msra.mxu0 0.0
        %765 = vmatpush.xpose.msra.mxu0 %v751
        %766 = vmatpush.xpose.msra.mxu0 %v749
        %767 = vmatpush.xpose.msra.mxu0 %v747
        %768 = vmatpush.xpose.msra.mxu0 %v745
        %769 = vmatmul.f32.gmra.mxu0 %v743
        %v770 = vpop.f32.mrf.mxu0
        %v771 = vadd.f32 0.0, %v770
        %772 = vdwg.mxu0
        %v773 = vadd.f32 %v666, %v771
        %774 = vrot.lane.b32.xlu0 %v458, 104
        %v775 = vpop.permute.xlu0 %774
        %776 = vrot.lane.b32.xlu0 %v459, 104
        %v777 = vpop.permute.xlu0 %776
        %v778 = vsel %vm465, %v775, 0
        %v780 = vsel %vm465, %v777, 0
        %782 = vmatpush.xpose.msra.mxu0 0.0
        %783 = vmatpush.xpose.msra.mxu0 0.0
        %784 = vmatpush.xpose.msra.mxu0 0.0
        %785 = vmatpush.xpose.msra.mxu0 0.0
        %786 = vmatpush.xpose.msra.mxu0 0.0
        %787 = vmatpush.xpose.msra.mxu0 0.0
        %788 = vmatpush.xpose.msra.mxu0 0.0
        %789 = vmatpush.xpose.msra.mxu0 0.0
        %790 = vmatpush.xpose.msra.mxu0 0.0
        %791 = vmatpush.xpose.msra.mxu0 0.0
        %792 = vmatpush.xpose.msra.mxu0 0.0
        %793 = vmatpush.xpose.msra.mxu0 0.0
        %794 = vmatpush.xpose.msra.mxu0 0.0
        %795 = vmatpush.xpose.msra.mxu0 0.0
        %796 = vmatpush.xpose.msra.mxu0 0.0
        %797 = vmatpush.xpose.msra.mxu0 %v780
        %798 = vmatmul.f32.gmra.mxu0 %v778
        %v799 = vpop.f32.mrf.mxu0
        %v800 = vadd.f32 0.0, %v799
        %801 = vdwg.mxu0
        %v802 = vsel %vm465, %v800, -inf
        %803 = vmax.xlane.f32.xlu0 %v802
        %v804 = vpop.xlane.xlu0 %803
        %v805 = vsub.f32 %v800, %v804
        %v806 = vmul.f32 %v805, 1.442695
        %v807 = vpow.pop %v806
        %v808 = vsel %vm465, %v807, 0.0
        %809 = vadd.xlane.f32.xlu0 %v808
        %v810 = vpop.xlane.xlu0 %809
        %v811 = vrcp.pop %v810
        %v812 = vmul.f32 %v807, %v811
        %v813 = vadd.f32 %v707, %v812
        %814 = vrot.lane.b32.xlu0 %v460, 104
        %v815 = vpop.permute.xlu0 %814
        %v818 = vsel %vm465, %v812, 0
        %820 = vmatpush.msra.mxu0 0.0
        %821 = vmatpush.msra.mxu0 0.0
        %822 = vmatpush.msra.mxu0 0.0
        %823 = vmatpush.msra.mxu0 0.0
        %824 = vmatpush.msra.mxu0 0.0
        %825 = vmatpush.msra.mxu0 0.0
        %826 = vmatpush.msra.mxu0 0.0
        %827 = vmatpush.msra.mxu0 0.0
        %828 = vmatpush.msra.mxu0 0.0
        %829 = vmatpush.msra.mxu0 0.0
        %830 = vmatpush.msra.mxu0 0.0
        %831 = vmatpush.msra.mxu0 0.0
        %832 = vmatpush.msra.mxu0 0.0
        %833 = vmatpush.msra.mxu0 0.0
        %834 = vmatpush.msra.mxu0 0.0
        %835 = vmatpush.msra.mxu0 %v815
        %836 = vmatmul.f32.gmra.mxu0 %v818
        %v837 = vpop.f32.mrf.mxu0
        %v838 = vadd.f32 0.0, %v837
        %839 = vdwg.mxu0
        %840 = vrot.lane.b32.xlu0 %v461, 104
        %v841 = vpop.permute.xlu0 %840
        %842 = vrot.lane.b32.xlu0 %v462, 104
        %v843 = vpop.permute.xlu0 %842
        %844 = vrot.lane.b32.xlu0 %v463, 104
        %v845 = vpop.permute.xlu0 %844
        %846 = vrot.lane.b32.xlu0 %v464, 104
        %v847 = vpop.permute.xlu0 %846
        %v849 = vsel %vm465, %v838, 0
        %v851 = vsel %vm465, %v841, 0
        %v853 = vsel %vm465, %v843, 0
        %v855 = vsel %vm465, %v845, 0
        %v857 = vsel %vm465, %v847, 0
        %859 = vmatpush.xpose.msra.mxu0 0.0
        %860 = vmatpush.xpose.msra.mxu0 0.0
        %861 = vmatpush.xpose.msra.mxu0 0.0
        %862 = vmatpush.xpose.msra.mxu0 0.0
        %863 = vmatpush.xpose.msra.mxu0 0.0
        %864 = vmatpush.xpose.msra.mxu0 0.0
        %865 = vmatpush.xpose.msra.mxu0 0.0
        %866 = vmatpush.xpose.msra.mxu0 0.0
        %867 = vmatpush.xpose.msra.mxu0 0.0
        %868 = vmatpush.xpose.msra.mxu0 0.0
        %869 = vmatpush.xpose.msra.mxu0 0.0
        %870 = vmatpush.xpose.msra.mxu0 0.0
        %871 = vmatpush.xpose.msra.mxu0 %v857
        %872 = vmatpush.xpose.msra.mxu0 %v855
        %873 = vmatpush.xpose.msra.mxu0 %v853
        %874 = vmatpush.xpose.msra.mxu0 %v851
        %875 = vmatmul.f32.gmra.mxu0 %v849
        %v876 = vpop.f32.mrf.mxu0
        %v877 = vadd.f32 0.0, %v876
        %878 = vdwg.mxu0
        %v879 = vadd.f32 %v773, %v877
        %v880 = vld [vmem:[%s6] sm:$0x1]
        %v882 = vperm.slane %v880, 0
        %v884 = vadd.f32 %v879, %v882
        %885 = vst.msk [vmem:[%s412] sm:$0xff] %vm422, %v884
        %v886 = vmul.f32 %v813, 0.25
        %887 = vst.msk [vmem:[%s390] sm:$0xff] %vm465, %v886
        %p888 = scmp.lt.s32.totalorder %s29, 1
        %s889 = scalar_select %p888, %s29, 1
        %p890 = scmp.lt.s32.totalorder %s30, 0
        %s891 = scalar_select %p890, %s30, 0
        %s892 = sadd.s32 %s891, %s889
        %s893 = smul.addr %s892, 8
        %s894 = scalar_lea.vmem %s7, %s893
        %s895 = sand.u32 %s239, 1
        %s896 = scalar_lea.sflag [#allocation4], %s895
        %s897 = sand.u32 %s239, 1
        %s898 = smul.addr %s897, 8
        %s899 = scalar_lea.vmem [#allocation7], %s898
        // Predicated region
        $region57: #{multi_head_attention_forward.3} parent=47 // pred_check
          %p900 = pneg %p221
        $region58: #{multi_head_attention_forward.3} parent=47 // pred_check_branch
          %902 = sbr.rel (%p900) target = $region60
        $region59: #{multi_head_attention_forward.3} parent=47 // pred_region
          _
        $region60: #{multi_head_attention_forward.3} parent=47 // pred_fallthru
          _
        // Predicated region
        $region61: #{multi_head_attention_forward.3} parent=47 // pred_check
          %p903 = pneg %p249
        $region62: #{multi_head_attention_forward.3} parent=47 // pred_check_branch
          %905 = sbr.rel (%p903) target = $region64
        $region63: #{multi_head_attention_forward.3} parent=47 // pred_region
          %907 = vsyncadd %s896, 0
          %s908 = sadd.s32 %s30, %s29
          %s909 = smul.addr %s908, 8
          %s910 = scalar_lea.hbm %s8, %s909
          %s912 = sshll.u32 %s899, 4
          %s913 = int_to_ptr.vmem [resolvable:$true] %s912
          %s914 = sshll.u32 %s910, 4
          %s915 = int_to_ptr.hbm [resolvable:$true] %s914
          %917 = dma.vmem_to_hbm [thread:$0]  %s913, 128, %s915, %s896
        $region64: #{multi_head_attention_forward.3} parent=47 // pred_fallthru
          _
      $region48: #{multi_head_attention_forward.3} parent=5 // pred_fallthru
        _
      %p918 = scmp.le.s32.totalorder 2, %s20
      // Predicated region
      $region65: #{multi_head_attention_forward.3} parent=5 // pred_check
        %p919 = pneg %p918
      $region66: #{multi_head_attention_forward.3} parent=5 // pred_check_branch
        %921 = sbr.rel (%p919) target = $region68
      $region67: #{multi_head_attention_forward.3} parent=5 // pred_region
        %s922 = ssub.s32 %s20, 2
        // Predicated region
        $region69: #{multi_head_attention_forward.3} parent=67 // pred_check
          %p923 = pneg %p227
        $region70: #{multi_head_attention_forward.3} parent=67 // pred_check_branch
          %925 = sbr.rel (%p923) target = $region72
        $region71: #{multi_head_attention_forward.3} parent=67 // pred_region
          %p926 = scmp.lt.s32.totalorder %s31, 1
          %s927 = scalar_select %p926, %s31, 1
          %p928 = scmp.lt.s32.totalorder %s32, 0
          %s929 = scalar_select %p928, %s32, 0
          %s930 = sadd.s32 %s929, %s927
          %s931 = smul.addr %s930, 8
          %s932 = scalar_lea.vmem %s7, %s931
        $region72: #{multi_head_attention_forward.3} parent=67 // pred_fallthru
          _
        // Predicated region
        $region73: #{multi_head_attention_forward.3} parent=67 // pred_check
          %p933 = pneg %p255
        $region74: #{multi_head_attention_forward.3} parent=67 // pred_check_branch
          %935 = sbr.rel (%p933) target = $region76
        $region75: #{multi_head_attention_forward.3} parent=67 // pred_region
          %s936 = sand.u32 %s240, 1
          %s937 = scalar_lea.sflag [#allocation4], %s936
          %s938 = sand.u32 %s240, 1
          %s939 = smul.addr %s938, 8
          %s940 = scalar_lea.vmem [#allocation7], %s939
          %942 = dma.done %s937, 128
        $region76: #{multi_head_attention_forward.3} parent=67 // pred_fallthru
          _
      $region68: #{multi_head_attention_forward.3} parent=5 // pred_fallthru
        _
    $region6: #{multi_head_attention_forward.3} parent=1 // loop_footer
      %s24 = sadd.s32 1, %s20
    $region7: #{multi_head_attention_forward.3} parent=1 // loop_footer_branch
      %19 = sbr.rel target = $region3
    $region8: #{multi_head_attention_forward.3} parent=1 // loop_exit
      _
    %943 = vsyncpa [#allocation3], 1
    %s944 = scalar_lea.sflag [#allocation3], 1
    %945 = vsyncpa %s944, 1
    %946 = vsyncpa [#allocation6], 1
    %947 = vsyncpa [#allocation4], 1
    %s948 = scalar_lea.sflag [#allocation4], 1
    %949 = vsyncpa %s948, 1

</llo_original>
